<compile_context>
chip_gen: v6e
topology: v6e:2x2x1
jax: 0.10.0
libtpu: 0.0.40
codegen_flags: <defaults>
</compile_context>

<pallas_src>
import jax
import jax.numpy as jnp
from jax.experimental import pallas as pl
from jax.experimental.pallas import tpu as pltpu

NEG_SLOPE = 0.2


def _round_up(x, m):
    return ((x + m - 1) // m) * m


def _choose_tile_b(batch):
    """Adaptive batch tile: minimal padding at small B, >=2 tiles at large B."""
    b = max(int(batch), 1)
    if b <= 512:
        # Small batch: single tile, rounded to the bf16 sublane pack (16 rows).
        return _round_up(b, 16)
    # Large batch: big tiles amortize the ~0.35us/step overhead, but keep at
    # least 2 grid steps so v7x's two TensorCores both get tiles; cap at 2048
    # so double-buffered activations stay far under the 64 MiB v7x VMEM.
    return min(_round_up(pl.cdiv(b, 2), 256), 2048)


def discriminator_kernel(x_ref, w1_ref, b1_ref, w2_ref, b2_ref, w3_ref, b3_ref,
                         o_ref):
    # Layer 1: (tile_b, D_pad) bf16 @ (D_pad, 512) bf16 -> f32 on the MXU.
    h1 = jnp.dot(x_ref[...], w1_ref[...], preferred_element_type=jnp.float32)
    h1 = h1 + b1_ref[...]
    h1 = jnp.where(h1 > 0, h1, NEG_SLOPE * h1)

    # Layer 2: 512 -> 256, bf16 MXU, f32 accumulate, f32 epilogue.
    h2 = jnp.dot(h1.astype(jnp.bfloat16), w2_ref[...],
                 preferred_element_type=jnp.float32)
    h2 = h2 + b2_ref[...]
    h2 = jnp.where(h2 > 0, h2, NEG_SLOPE * h2)

    # Layer 3 (256 -> 1): contract as W3 @ h2^T so the per-sample scalars come
    # out lane-dense as (1, tile_b) -> unmasked stores + dense writeback DMA.
    h3 = jax.lax.dot_general(w3_ref[...], h2,
                             dimension_numbers=(((1,), (1,)), ((), ())),
                             preferred_element_type=jnp.float32)   # (1, tile_b)
    h3 = h3 + b3_ref[...]

    # Numerically stable sigmoid; exact reciprocal (EUP exp, negligible cost).
    e = jnp.exp(-jnp.abs(h3))
    num = jnp.where(h3 >= 0, 1.0, e)
    o_ref[...] = (num / (1.0 + e)).astype(o_ref.dtype)


def prepare_params(params):
    """One-time weight prep (hoisted out of the per-forward-call path):
    pad D_in to a lane-aligned multiple of 128, cast MXU weights to bf16."""
    w1, b1, w2, b2, w3, b3 = params
    d_in = w1.shape[0]
    d_pad = _round_up(d_in, 128)
    if d_pad != d_in:                       # padded rows are zero -> exact
        w1 = jnp.pad(w1, ((0, d_pad - d_in), (0, 0)))
    return {
        "d_in": d_in,
        "d_pad": d_pad,
        "w1": w1.astype(jnp.bfloat16),
        "b1": b1.astype(jnp.float32),
        "w2": w2.astype(jnp.bfloat16),
        "b2": b2.astype(jnp.float32),
        "w3": w3.astype(jnp.float32),       # (1, 256) row, f32 for layer-3
        "b3": b3.astype(jnp.float32),       # (1, 1)
    }


def discriminator_forward(img, prep, *, tile_b=None):
    """img: (B, C, H, W) float32. Returns (B, 1) float32."""
    B = img.shape[0]
    d_in, d_pad = prep["d_in"], prep["d_pad"]
    h1_dim = prep["w1"].shape[1]            # 512
    h2_dim = prep["w2"].shape[1]            # 256

    if tile_b is None:
        tile_b = _choose_tile_b(B)
    b_pad = _round_up(max(B, 1), tile_b)
    n_tiles = b_pad // tile_b

    # Single fused pass over the activations: flatten -> pad batch & feature
    # dims -> bf16 (XLA fuses pad+convert into one read/write of x).
    x_b = jnp.pad(img.reshape(B, d_in),
                  ((0, b_pad - B), (0, d_pad - d_in))).astype(jnp.bfloat16)

    flops = 2 * b_pad * (d_pad * h1_dim + h1_dim * h2_dim + h2_dim)
    bytes_accessed = (x_b.size * 2 + prep["w1"].size * 2 + prep["w2"].size * 2
                      + (prep["b1"].size + prep["b2"].size
                         + prep["w3"].size + prep["b3"].size) * 4
                      + b_pad * 4)

    out = pl.pallas_call(
        discriminator_kernel,
        out_shape=jax.ShapeDtypeStruct((n_tiles, tile_b), jnp.float32),
        grid=(n_tiles,),
        in_specs=[
            # Activations: streamed per batch tile (double-buffered by default).
            pl.BlockSpec((tile_b, d_pad), lambda i: (i, 0)),
            # Weights / biases: constant block index -> stay resident in VMEM.
            pl.BlockSpec((d_pad, h1_dim), lambda i: (0, 0)),
            pl.BlockSpec((1, h1_dim), lambda i: (0, 0)),
            pl.BlockSpec((h1_dim, h2_dim), lambda i: (0, 0)),
            pl.BlockSpec((1, h2_dim), lambda i: (0, 0)),
            pl.BlockSpec((1, h2_dim), lambda i: (0, 0)),   # W3 row
            pl.BlockSpec((1, 1), lambda i: (0, 0)),        # b3
        ],
        # Lane-dense output block: one (1, tile_b) row per grid step.
        out_specs=pl.BlockSpec((1, tile_b), lambda i: (i, 0)),
        compiler_params=pltpu.CompilerParams(
            dimension_semantics=("parallel",),
            vmem_limit_bytes=32 * 1024 * 1024,   # safe on v7x's 64 MiB VMEM
        ),
        cost_estimate=pl.CostEstimate(
            flops=flops,
            transcendentals=b_pad,
            bytes_accessed=bytes_accessed,
        ),
    )(x_b, prep["w1"], prep["b1"], prep["w2"], prep["b2"],
      prep["w3"], prep["b3"])

    return out.reshape(b_pad, 1)[:B]


def init_params(key, d_in):
    """Deterministic init matching the module's layer shapes.

    W1/W2 stored (in_features, out_features); W3 as a (1, 256) row; biases as
    (1, out_features)."""
    k1, k2, k3, k4, k5, k6 = jax.random.split(key, 6)

    def uniform(k, shape, fan_in):
        bound = 1.0 / jnp.sqrt(fan_in)
        return jax.random.uniform(k, shape, jnp.float32, -bound, bound)

    w1 = uniform(k1, (d_in, 512), d_in)
    b1 = uniform(k2, (1, 512), d_in)
    w2 = uniform(k3, (512, 256), 512)
    b2 = uniform(k4, (1, 256), 512)
    w3 = uniform(k5, (1, 256), 256)
    b3 = uniform(k6, (1, 1), 256)
    return (w1, b1, w2, b2, w3, b3)


def _reference_forward(img, params):
    """Pure-JAX reference using the same bf16-in / f32-accumulate precision."""
    w1, b1, w2, b2, w3, b3 = params
    x = img.reshape(img.shape[0], -1)
    h1 = jnp.dot(x.astype(jnp.bfloat16), w1.astype(jnp.bfloat16),
                 preferred_element_type=jnp.float32) + b1
    h1 = jnp.where(h1 > 0, h1, NEG_SLOPE * h1)
    h2 = jnp.dot(h1.astype(jnp.bfloat16), w2.astype(jnp.bfloat16),
                 preferred_element_type=jnp.float32) + b2
    h2 = jnp.where(h2 > 0, h2, NEG_SLOPE * h2)
    h3 = h2 @ w3.T + b3
    return jax.nn.sigmoid(h3)


if __name__ == "__main__":
    key = jax.random.PRNGKey(0)
    k_img, k_params, k_img2 = jax.random.split(key, 3)

    # MNIST-like image shape: (C, H, W) = (1, 28, 28) -> D_in = 784 (padded to
    # 896 once, inside prepare_params).
    img_shape = (1, 28, 28)
    d_in = img_shape[0] * img_shape[1] * img_shape[2]
    params = init_params(k_params, d_in)
    prep = prepare_params(params)

    # Small-batch path (single 16-row tile instead of padding to 256).
    batch = 8
    img = jax.random.normal(k_img, (batch,) + img_shape, dtype=jnp.float32)
    out = jax.block_until_ready(discriminator_forward(img, prep))
    ref = _reference_forward(img, params)
    assert out.shape == (batch, 1), out.shape
    assert jnp.allclose(out, ref, atol=1e-2, rtol=1e-2), "mismatch vs reference"
    assert bool(jnp.all(jnp.isfinite(out))), "non-finite output"

    # Multi-tile path (grid > 1, same structure the v7x megacore sharding uses).
    batch2 = 70
    img2 = jax.random.normal(k_img2, (batch2,) + img_shape, dtype=jnp.float32)
    out2 = jax.block_until_ready(discriminator_forward(img2, prep, tile_b=32))
    ref2 = _reference_forward(img2, params)
    assert out2.shape == (batch2, 1), out2.shape
    assert jnp.allclose(out2, ref2, atol=1e-2, rtol=1e-2), "mismatch (multi-tile)"

    print("KERNEL_OK")
</pallas_src>

<mosaic_0001>
module attributes {stable_mosaic.version = 11 : i64} {
  func.func @discriminator_kernel(%arg0: i32, %arg1: memref<16x896xbf16, #tpu.memory_space<vmem>>, %arg2: memref<896x512xbf16, #tpu.memory_space<vmem>>, %arg3: memref<1x512xf32, #tpu.memory_space<vmem>>, %arg4: memref<512x256xbf16, #tpu.memory_space<vmem>>, %arg5: memref<1x256xf32, #tpu.memory_space<vmem>>, %arg6: memref<1x256xf32, #tpu.memory_space<vmem>>, %arg7: memref<1x1xf32, #tpu.memory_space<vmem>>, %arg8: memref<1x16xf32, #tpu.memory_space<vmem>>) attributes {dimension_semantics = [#tpu.dimension_semantics<parallel>], iteration_bounds = array<i64: 1>, scalar_prefetch = 0 : i64, scratch_operands = 0 : i64, tpu.core_type = #tpu.core_type<tc>, window_params = [{transform_indices = @transform_0, window_bounds = array<i64: 16, 896>}, {pipeline_mode = #tpu.pipeline_mode<synchronous>, transform_indices = @transform_1, window_bounds = array<i64: 896, 512>}, {pipeline_mode = #tpu.pipeline_mode<synchronous>, transform_indices = @transform_2, window_bounds = array<i64: 1, 512>}, {pipeline_mode = #tpu.pipeline_mode<synchronous>, transform_indices = @transform_3, window_bounds = array<i64: 512, 256>}, {pipeline_mode = #tpu.pipeline_mode<synchronous>, transform_indices = @transform_4, window_bounds = array<i64: 1, 256>}, {pipeline_mode = #tpu.pipeline_mode<synchronous>, transform_indices = @transform_5, window_bounds = array<i64: 1, 256>}, {pipeline_mode = #tpu.pipeline_mode<synchronous>, transform_indices = @transform_6, window_bounds = array<i64: 1, 1>}, {transform_indices = @transform_7, window_bounds = array<i64: 1, 16>}]} {
    %c0 = arith.constant 0 : index
    %c0_0 = arith.constant 0 : index
    %0 = vector.load %arg1[%c0, %c0_0] : memref<16x896xbf16, #tpu.memory_space<vmem>>, vector<16x896xbf16>
    %c0_1 = arith.constant 0 : index
    %c0_2 = arith.constant 0 : index
    %1 = vector.load %arg2[%c0_1, %c0_2] : memref<896x512xbf16, #tpu.memory_space<vmem>>, vector<896x512xbf16>
    %cst = arith.constant dense<0.000000e+00> : vector<16x512xf32>
    %2 = tpu.matmul %0, %1, %cst {dimension_numbers = #tpu.dot_dimension_numbers<[1], [0], [0], [1], [0, 0, 1, 1], [], []>} : vector<16x896xbf16>, vector<896x512xbf16>, vector<16x512xf32> -> vector<16x512xf32>
    %c0_3 = arith.constant 0 : index
    %c0_4 = arith.constant 0 : index
    %3 = vector.load %arg3[%c0_3, %c0_4] : memref<1x512xf32, #tpu.memory_space<vmem>>, vector<1x512xf32>
    %4 = vector.broadcast %3 : vector<1x512xf32> to vector<16x512xf32>
    %5 = arith.addf %2, %4 : vector<16x512xf32>
    %cst_5 = arith.constant 0.000000e+00 : f32
    %6 = vector.broadcast %cst_5 : f32 to vector<16x512xf32>
    %7 = arith.cmpf ogt, %5, %6 : vector<16x512xf32>
    %cst_6 = arith.constant 2.000000e-01 : f32
    %8 = vector.broadcast %cst_6 : f32 to vector<16x512xf32>
    %9 = arith.mulf %8, %5 : vector<16x512xf32>
    %10 = arith.select %7, %5, %9 : vector<16x512xi1>, vector<16x512xf32>
    %11 = arith.truncf %10 : vector<16x512xf32> to vector<16x512xbf16>
    %c0_7 = arith.constant 0 : index
    %c0_8 = arith.constant 0 : index
    %12 = vector.load %arg4[%c0_7, %c0_8] : memref<512x256xbf16, #tpu.memory_space<vmem>>, vector<512x256xbf16>
    %cst_9 = arith.constant dense<0.000000e+00> : vector<16x256xf32>
    %13 = tpu.matmul %11, %12, %cst_9 {dimension_numbers = #tpu.dot_dimension_numbers<[1], [0], [0], [1], [0, 0, 1, 1], [], []>} : vector<16x512xbf16>, vector<512x256xbf16>, vector<16x256xf32> -> vector<16x256xf32>
    %c0_10 = arith.constant 0 : index
    %c0_11 = arith.constant 0 : index
    %14 = vector.load %arg5[%c0_10, %c0_11] : memref<1x256xf32, #tpu.memory_space<vmem>>, vector<1x256xf32>
    %15 = vector.broadcast %14 : vector<1x256xf32> to vector<16x256xf32>
    %16 = arith.addf %13, %15 : vector<16x256xf32>
    %cst_12 = arith.constant 0.000000e+00 : f32
    %17 = vector.broadcast %cst_12 : f32 to vector<16x256xf32>
    %18 = arith.cmpf ogt, %16, %17 : vector<16x256xf32>
    %cst_13 = arith.constant 2.000000e-01 : f32
    %19 = vector.broadcast %cst_13 : f32 to vector<16x256xf32>
    %20 = arith.mulf %19, %16 : vector<16x256xf32>
    %21 = arith.select %18, %16, %20 : vector<16x256xi1>, vector<16x256xf32>
    %c0_14 = arith.constant 0 : index
    %c0_15 = arith.constant 0 : index
    %22 = vector.load %arg6[%c0_14, %c0_15] : memref<1x256xf32, #tpu.memory_space<vmem>>, vector<1x256xf32>
    %cst_16 = arith.constant dense<0.000000e+00> : vector<1x16xf32>
    %23 = tpu.matmul %22, %21, %cst_16 {dimension_numbers = #tpu.dot_dimension_numbers<[1], [1], [0], [0], [0, 0, 1, 0], [], []>} : vector<1x256xf32>, vector<16x256xf32>, vector<1x16xf32> -> vector<1x16xf32>
    %c0_17 = arith.constant 0 : index
    %c0_18 = arith.constant 0 : index
    %24 = vector.load %arg7[%c0_17, %c0_18] : memref<1x1xf32, #tpu.memory_space<vmem>>, vector<1x1xf32>
    %25 = vector.broadcast %24 : vector<1x1xf32> to vector<1x16xf32>
    %26 = arith.addf %23, %25 : vector<1x16xf32>
    %27 = math.absf %26 : vector<1x16xf32>
    %cst_19 = arith.constant 0.000000e+00 : f32
    %28 = vector.broadcast %cst_19 : f32 to vector<1x16xf32>
    %29 = arith.subf %28, %27 : vector<1x16xf32>
    %30 = math.exp %29 : vector<1x16xf32>
    %cst_20 = arith.constant 0.000000e+00 : f32
    %31 = vector.broadcast %cst_20 : f32 to vector<1x16xf32>
    %32 = arith.cmpf oge, %26, %31 : vector<1x16xf32>
    %cst_21 = arith.constant 1.000000e+00 : f32
    %33 = vector.broadcast %cst_21 : f32 to vector<1x16xf32>
    %34 = arith.select %32, %33, %30 : vector<1x16xi1>, vector<1x16xf32>
    %cst_22 = arith.constant 1.000000e+00 : f32
    %35 = vector.broadcast %cst_22 : f32 to vector<1x16xf32>
    %36 = arith.addf %35, %30 : vector<1x16xf32>
    %37 = arith.divf %34, %36 : vector<1x16xf32>
    %c0_23 = arith.constant 0 : index
    %c0_24 = arith.constant 0 : index
    %38 = vector.load %arg8[%c0_23, %c0_24] : memref<1x16xf32, #tpu.memory_space<vmem>>, vector<1x16xf32>
    tpu.vector_store %arg8[%c0_23, %c0_24], %37 {strides = array<i32>} : memref<1x16xf32, #tpu.memory_space<vmem>>, vector<1x16xf32>,
    return
  }
  func.func @transform_0(%arg0: i32) -> (i32, i32) {
    %c0_i32 = arith.constant 0 : i32
    %c0_i32_0 = arith.constant 0 : i32
    return %arg0, %c0_i32 : i32, i32
  }
  func.func @transform_1(%arg0: i32) -> (i32, i32) {
    %c0_i32 = arith.constant 0 : i32
    %c0_i32_0 = arith.constant 0 : i32
    %c0_i32_1 = arith.constant 0 : i32
    return %c0_i32, %c0_i32_0 : i32, i32
  }
  func.func @transform_2(%arg0: i32) -> (i32, i32) {
    %c0_i32 = arith.constant 0 : i32
    %c0_i32_0 = arith.constant 0 : i32
    %c0_i32_1 = arith.constant 0 : i32
    return %c0_i32, %c0_i32_0 : i32, i32
  }
  func.func @transform_3(%arg0: i32) -> (i32, i32) {
    %c0_i32 = arith.constant 0 : i32
    %c0_i32_0 = arith.constant 0 : i32
    %c0_i32_1 = arith.constant 0 : i32
    return %c0_i32, %c0_i32_0 : i32, i32
  }
  func.func @transform_4(%arg0: i32) -> (i32, i32) {
    %c0_i32 = arith.constant 0 : i32
    %c0_i32_0 = arith.constant 0 : i32
    %c0_i32_1 = arith.constant 0 : i32
    return %c0_i32, %c0_i32_0 : i32, i32
  }
  func.func @transform_5(%arg0: i32) -> (i32, i32) {
    %c0_i32 = arith.constant 0 : i32
    %c0_i32_0 = arith.constant 0 : i32
    %c0_i32_1 = arith.constant 0 : i32
    return %c0_i32, %c0_i32_0 : i32, i32
  }
  func.func @transform_6(%arg0: i32) -> (i32, i32) {
    %c0_i32 = arith.constant 0 : i32
    %c0_i32_0 = arith.constant 0 : i32
    %c0_i32_1 = arith.constant 0 : i32
    return %c0_i32, %c0_i32_0 : i32, i32
  }
  func.func @transform_7(%arg0: i32) -> (i32, i32) {
    %c0_i32 = arith.constant 0 : i32
    %c0_i32_0 = arith.constant 0 : i32
    return %arg0, %c0_i32 : i32, i32
  }
}

</mosaic_0001>

<llo_original>
// kernel: tpu_custom_call.1
$region0: #{tpu_custom_call.1}
  #allocation0 [shape = 'u32[]', space=smem, size = 0x4, offset = 0x4, fixed_abs, tag = 'smem constant byte address 0x4 - core index']
  #allocation1 [shape = 'u32[144,128]{1,0:T(1,128)}', space=vmem, size = 0x12000, scoped, tag = 'internal scratch']
  #allocation2 [shape = 'f32[1,1]{1,0:T(1,128)S(1)}', space=vmem, size = 0x200, scoped, tag = 'scoped memory for tpu_custom_call.1']
  %s0 = inlined_call_operand.hbm [shape: bf16[16,896], index: 0, kind: input, shape index: {}]
  %s1 = inlined_call_operand.hbm [shape: bf16[896,512], index: 1, kind: input, shape index: {}]
  %s2 = inlined_call_operand.vmem [shape: f32[1,512], index: 2, kind: input, shape index: {}]
  %s3 = inlined_call_operand.hbm [shape: bf16[512,256], index: 3, kind: input, shape index: {}]
  %s4 = inlined_call_operand.vmem [shape: f32[1,256], index: 4, kind: input, shape index: {}]
  %s5 = inlined_call_operand.vmem [shape: f32[1,256], index: 5, kind: input, shape index: {}]
  %s6 = inlined_call_operand.<no memory space> [shape: f32[1,1], index: 6, kind: input, shape index: {}]
  %s7 = inlined_call_operand.hbm [shape: f32[1,16], index: 7, kind: output, shape index: {}]
  %s8 = sld [smem:[#allocation0]]
  $region50: #{tpu_custom_call.1} parent=0
    _
  %s10 = ssub.s32 1, %s8
  %s11 = scalar_select 0, %s10, %s8
  %v12 = vstv %s6
  %13 = vst [vmem:[#allocation2] sm:$0x1] %v12
  $region1: #{tpu_custom_call.1} parent=0
    #allocation3 [shape = 'u8[28672]{0}', space=vmem, size = 0x7000, scoped, tag = 'input window, operand 0, single buffered']
    #allocation4 [shape = 's32[1]{0}', space=sflag, size = 0x4, scoped, tag = 'scoped memory for tpu_custom_call.1']
    #allocation5 [shape = 's32[1]{0}', space=sflag, size = 0x4, scoped, tag = 'scoped memory for tpu_custom_call.1']
    #allocation6 [shape = 'u8[917504]{0}', space=vmem, size = 0xe0000, scoped, tag = 'input window, operand 1, single buffered']
    #allocation7 [shape = 's32[1]{0}', space=sflag, size = 0x4, scoped, tag = 'scoped memory for tpu_custom_call.1']
    #allocation8 [shape = 'u8[262144]{0}', space=vmem, size = 0x40000, scoped, tag = 'input window, operand 3, single buffered']
    #allocation9 [shape = 'u8[512]{0}', space=vmem, size = 0x400, scoped, tag = 'output window, operand 0, single buffered']
    %14 = vsyncpa [#allocation4], 0
    %15 = vsyncpa [#allocation7], 0
    %16 = vsyncpa [#allocation5], 0
    // Predicated region
    $region2: #{tpu_custom_call.1} parent=1 // pred_check
      _
    $region3: #{tpu_custom_call.1} parent=1 // pred_check_branch
      %18 = sbr.rel (0) target = $region5
    $region4: #{tpu_custom_call.1} parent=1 // pred_region
      %s20 = ssub.s32 896, 896
      %21 = vsyncadd [#allocation4], %s20
      %s22 = sshll.u32 [#allocation3], 4
      %s23 = int_to_ptr.vmem [resolvable:$true] %s22
      %28 = dma.hbm_to_vmem [thread:$0]  %s0, 896, %s23, [#allocation4], 448, 448, 28
    $region5: #{tpu_custom_call.1} parent=1 // pred_fallthru
      _
    // Predicated region
    $region6: #{tpu_custom_call.1} parent=1 // pred_check
      _
    $region7: #{tpu_custom_call.1} parent=1 // pred_check_branch
      %30 = sbr.rel (0) target = $region9
    $region8: #{tpu_custom_call.1} parent=1 // pred_region
      %s32 = ssub.s32 28672, 28672
      %33 = vsyncadd [#allocation7], %s32
      %s34 = sshll.u32 [#allocation6], 4
      %s35 = int_to_ptr.vmem [resolvable:$true] %s34
      %40 = dma.hbm_to_vmem [thread:$0]  %s1, 28672, %s35, [#allocation7], 256, 256, 16
    $region9: #{tpu_custom_call.1} parent=1 // pred_fallthru
      _
    // Predicated region
    $region10: #{tpu_custom_call.1} parent=1 // pred_check
      _
    $region11: #{tpu_custom_call.1} parent=1 // pred_check_branch
      %42 = sbr.rel (0) target = $region13
    $region12: #{tpu_custom_call.1} parent=1 // pred_region
      _
    $region13: #{tpu_custom_call.1} parent=1 // pred_fallthru
      _
    // Predicated region
    $region14: #{tpu_custom_call.1} parent=1 // pred_check
      _
    $region15: #{tpu_custom_call.1} parent=1 // pred_check_branch
      %44 = sbr.rel (0) target = $region17
    $region16: #{tpu_custom_call.1} parent=1 // pred_region
      %s46 = ssub.s32 8192, 8192
      %47 = vsyncadd [#allocation7], %s46
      %s48 = sshll.u32 [#allocation8], 4
      %s49 = int_to_ptr.vmem [resolvable:$true] %s48
      %54 = dma.hbm_to_vmem [thread:$0]  %s3, 8192, %s49, [#allocation7], 128, 128, 8
    $region17: #{tpu_custom_call.1} parent=1 // pred_fallthru
      _
    // Predicated region
    $region18: #{tpu_custom_call.1} parent=1 // pred_check
      _
    $region19: #{tpu_custom_call.1} parent=1 // pred_check_branch
      %56 = sbr.rel (0) target = $region21
    $region20: #{tpu_custom_call.1} parent=1 // pred_region
      _
    $region21: #{tpu_custom_call.1} parent=1 // pred_fallthru
      _
    // Predicated region
    $region22: #{tpu_custom_call.1} parent=1 // pred_check
      _
    $region23: #{tpu_custom_call.1} parent=1 // pred_check_branch
      %58 = sbr.rel (0) target = $region25
    $region24: #{tpu_custom_call.1} parent=1 // pred_region
      _
    $region25: #{tpu_custom_call.1} parent=1 // pred_fallthru
      _
    // Predicated region
    $region26: #{tpu_custom_call.1} parent=1 // pred_check
      _
    $region27: #{tpu_custom_call.1} parent=1 // pred_check_branch
      %60 = sbr.rel (0) target = $region29
    $region28: #{tpu_custom_call.1} parent=1 // pred_region
      _
    $region29: #{tpu_custom_call.1} parent=1 // pred_fallthru
      _
    // Predicated region
    $region30: #{tpu_custom_call.1} parent=1 // pred_check
      _
    $region31: #{tpu_custom_call.1} parent=1 // pred_check_branch
      %62 = sbr.rel (0) target = $region33
    $region32: #{tpu_custom_call.1} parent=1 // pred_region
      %63 = dma.done [#allocation4], 896
    $region33: #{tpu_custom_call.1} parent=1 // pred_fallthru
      _
    // Predicated region
    $region34: #{tpu_custom_call.1} parent=1 // pred_check
      _
    $region35: #{tpu_custom_call.1} parent=1 // pred_check_branch
      %65 = sbr.rel (0) target = $region37
    $region36: #{tpu_custom_call.1} parent=1 // pred_region
      %66 = dma.done [#allocation7], 28672
    $region37: #{tpu_custom_call.1} parent=1 // pred_fallthru
      _
    // Predicated region
    $region38: #{tpu_custom_call.1} parent=1 // pred_check
      _
    $region39: #{tpu_custom_call.1} parent=1 // pred_check_branch
      %68 = sbr.rel (0) target = $region41
    $region40: #{tpu_custom_call.1} parent=1 // pred_region
      %69 = dma.done [#allocation7], 8192
    $region41: #{tpu_custom_call.1} parent=1 // pred_fallthru
      _
    %v71 = vld [vmem:[#allocation3] sm:$0xff]
    %v72 = vld [vmem:[#allocation3 + $0x8] sm:$0xff]
    %v73 = vld [vmem:[#allocation3 + $0x10] sm:$0xff]
    %v74 = vld [vmem:[#allocation3 + $0x18] sm:$0xf]
    %v75 = vld [vmem:[#allocation3 + $0x1c] sm:$0xff]
    %v76 = vld [vmem:[#allocation3 + $0x24] sm:$0xff]
    %v77 = vld [vmem:[#allocation3 + $0x2c] sm:$0xff]
    %v78 = vld [vmem:[#allocation3 + $0x34] sm:$0xf]
    %v79 = vld [vmem:[#allocation6] sm:$0xff]
    %v80 = vld [vmem:[#allocation6 + $0x8] sm:$0xff]
    %v81 = vld [vmem:[#allocation6 + $0x10] sm:$0xff]
    %v82 = vld [vmem:[#allocation6 + $0x18] sm:$0xff]
    %v83 = vld [vmem:[#allocation6 + $0x20] sm:$0xff]
    %v84 = vld [vmem:[#allocation6 + $0x28] sm:$0xff]
    %v85 = vld [vmem:[#allocation6 + $0x30] sm:$0xff]
    %v86 = vld [vmem:[#allocation6 + $0x38] sm:$0xff]
    %v87 = vld [vmem:[#allocation6 + $0x40] sm:$0xff]
    %v88 = vld [vmem:[#allocation6 + $0x48] sm:$0xff]
    %v89 = vld [vmem:[#allocation6 + $0x50] sm:$0xff]
    %v90 = vld [vmem:[#allocation6 + $0x58] sm:$0xff]
    %v91 = vld [vmem:[#allocation6 + $0x60] sm:$0xff]
    %v92 = vld [vmem:[#allocation6 + $0x68] sm:$0xff]
    %v93 = vld [vmem:[#allocation6 + $0x70] sm:$0xff]
    %v94 = vld [vmem:[#allocation6 + $0x78] sm:$0xff]
    %v95 = vld [vmem:[#allocation6 + $0x80] sm:$0xff]
    %v96 = vld [vmem:[#allocation6 + $0x88] sm:$0xff]
    %v97 = vld [vmem:[#allocation6 + $0x90] sm:$0xff]
    %v98 = vld [vmem:[#allocation6 + $0x98] sm:$0xff]
    %v99 = vld [vmem:[#allocation6 + $0xa0] sm:$0xff]
    %v100 = vld [vmem:[#allocation6 + $0xa8] sm:$0xff]
    %v101 = vld [vmem:[#allocation6 + $0xb0] sm:$0xff]
    %v102 = vld [vmem:[#allocation6 + $0xb8] sm:$0xff]
    %v103 = vld [vmem:[#allocation6 + $0xc0] sm:$0xff]
    %v104 = vld [vmem:[#allocation6 + $0xc8] sm:$0xff]
    %v105 = vld [vmem:[#allocation6 + $0xd0] sm:$0xff]
    %v106 = vld [vmem:[#allocation6 + $0xd8] sm:$0xff]
    %v107 = vld [vmem:[#allocation6 + $0xe0] sm:$0xff]
    %v108 = vld [vmem:[#allocation6 + $0xe8] sm:$0xff]
    %v109 = vld [vmem:[#allocation6 + $0xf0] sm:$0xff]
    %v110 = vld [vmem:[#allocation6 + $0xf8] sm:$0xff]
    %v111 = vld [vmem:[#allocation6 + $0x100] sm:$0xff]
    %v112 = vld [vmem:[#allocation6 + $0x108] sm:$0xff]
    %v113 = vld [vmem:[#allocation6 + $0x110] sm:$0xff]
    %v114 = vld [vmem:[#allocation6 + $0x118] sm:$0xff]
    %v115 = vld [vmem:[#allocation6 + $0x120] sm:$0xff]
    %v116 = vld [vmem:[#allocation6 + $0x128] sm:$0xff]
    %v117 = vld [vmem:[#allocation6 + $0x130] sm:$0xff]
    %v118 = vld [vmem:[#allocation6 + $0x138] sm:$0xff]
    %v119 = vld [vmem:[#allocation6 + $0x140] sm:$0xff]
    %v120 = vld [vmem:[#allocation6 + $0x148] sm:$0xff]
    %v121 = vld [vmem:[#allocation6 + $0x150] sm:$0xff]
    %v122 = vld [vmem:[#allocation6 + $0x158] sm:$0xff]
    %v123 = vld [vmem:[#allocation6 + $0x160] sm:$0xff]
    %v124 = vld [vmem:[#allocation6 + $0x168] sm:$0xff]
    %v125 = vld [vmem:[#allocation6 + $0x170] sm:$0xff]
    %v126 = vld [vmem:[#allocation6 + $0x178] sm:$0xff]
    %v127 = vld [vmem:[#allocation6 + $0x180] sm:$0xff]
    %v128 = vld [vmem:[#allocation6 + $0x188] sm:$0xff]
    %v129 = vld [vmem:[#allocation6 + $0x190] sm:$0xff]
    %v130 = vld [vmem:[#allocation6 + $0x198] sm:$0xff]
    %v131 = vld [vmem:[#allocation6 + $0x1a0] sm:$0xff]
    %v132 = vld [vmem:[#allocation6 + $0x1a8] sm:$0xff]
    %v133 = vld [vmem:[#allocation6 + $0x1b0] sm:$0xff]
    %v134 = vld [vmem:[#allocation6 + $0x1b8] sm:$0xff]
    %v135 = vld [vmem:[#allocation6 + $0x1c0] sm:$0xff]
    %v136 = vld [vmem:[#allocation6 + $0x1c8] sm:$0xff]
    %v137 = vld [vmem:[#allocation6 + $0x1d0] sm:$0xff]
    %v138 = vld [vmem:[#allocation6 + $0x1d8] sm:$0xff]
    %v139 = vld [vmem:[#allocation6 + $0x1e0] sm:$0xff]
    %v140 = vld [vmem:[#allocation6 + $0x1e8] sm:$0xff]
    %v141 = vld [vmem:[#allocation6 + $0x1f0] sm:$0xff]
    %v142 = vld [vmem:[#allocation6 + $0x1f8] sm:$0xff]
    %v143 = vld [vmem:[#allocation6 + $0x200] sm:$0xff]
    %v144 = vld [vmem:[#allocation6 + $0x208] sm:$0xff]
    %v145 = vld [vmem:[#allocation6 + $0x210] sm:$0xff]
    %v146 = vld [vmem:[#allocation6 + $0x218] sm:$0xff]
    %v147 = vld [vmem:[#allocation6 + $0x220] sm:$0xff]
    %v148 = vld [vmem:[#allocation6 + $0x228] sm:$0xff]
    %v149 = vld [vmem:[#allocation6 + $0x230] sm:$0xff]
    %v150 = vld [vmem:[#allocation6 + $0x238] sm:$0xff]
    %v151 = vld [vmem:[#allocation6 + $0x240] sm:$0xff]
    %v152 = vld [vmem:[#allocation6 + $0x248] sm:$0xff]
    %v153 = vld [vmem:[#allocation6 + $0x250] sm:$0xff]
    %v154 = vld [vmem:[#allocation6 + $0x258] sm:$0xff]
    %v155 = vld [vmem:[#allocation6 + $0x260] sm:$0xff]
    %v156 = vld [vmem:[#allocation6 + $0x268] sm:$0xff]
    %v157 = vld [vmem:[#allocation6 + $0x270] sm:$0xff]
    %v158 = vld [vmem:[#allocation6 + $0x278] sm:$0xff]
    %v159 = vld [vmem:[#allocation6 + $0x280] sm:$0xff]
    %v160 = vld [vmem:[#allocation6 + $0x288] sm:$0xff]
    %v161 = vld [vmem:[#allocation6 + $0x290] sm:$0xff]
    %v162 = vld [vmem:[#allocation6 + $0x298] sm:$0xff]
    %v163 = vld [vmem:[#allocation6 + $0x2a0] sm:$0xff]
    %v164 = vld [vmem:[#allocation6 + $0x2a8] sm:$0xff]
    %v165 = vld [vmem:[#allocation6 + $0x2b0] sm:$0xff]
    %v166 = vld [vmem:[#allocation6 + $0x2b8] sm:$0xff]
    %v167 = vld [vmem:[#allocation6 + $0x2c0] sm:$0xff]
    %v168 = vld [vmem:[#allocation6 + $0x2c8] sm:$0xff]
    %v169 = vld [vmem:[#allocation6 + $0x2d0] sm:$0xff]
    %v170 = vld [vmem:[#allocation6 + $0x2d8] sm:$0xff]
    %v171 = vld [vmem:[#allocation6 + $0x2e0] sm:$0xff]
    %v172 = vld [vmem:[#allocation6 + $0x2e8] sm:$0xff]
    %v173 = vld [vmem:[#allocation6 + $0x2f0] sm:$0xff]
    %v174 = vld [vmem:[#allocation6 + $0x2f8] sm:$0xff]
    %v175 = vld [vmem:[#allocation6 + $0x300] sm:$0xff]
    %v176 = vld [vmem:[#allocation6 + $0x308] sm:$0xff]
    %v177 = vld [vmem:[#allocation6 + $0x310] sm:$0xff]
    %v178 = vld [vmem:[#allocation6 + $0x318] sm:$0xff]
    %v179 = vld [vmem:[#allocation6 + $0x320] sm:$0xff]
    %v180 = vld [vmem:[#allocation6 + $0x328] sm:$0xff]
    %v181 = vld [vmem:[#allocation6 + $0x330] sm:$0xff]
    %v182 = vld [vmem:[#allocation6 + $0x338] sm:$0xff]
    %v183 = vld [vmem:[#allocation6 + $0x340] sm:$0xff]
    %v184 = vld [vmem:[#allocation6 + $0x348] sm:$0xff]
    %v185 = vld [vmem:[#allocation6 + $0x350] sm:$0xff]
    %v186 = vld [vmem:[#allocation6 + $0x358] sm:$0xff]
    %v187 = vld [vmem:[#allocation6 + $0x360] sm:$0xff]
    %v188 = vld [vmem:[#allocation6 + $0x368] sm:$0xff]
    %v189 = vld [vmem:[#allocation6 + $0x370] sm:$0xff]
    %v190 = vld [vmem:[#allocation6 + $0x378] sm:$0xff]
    %v191 = vld [vmem:[#allocation6 + $0x380] sm:$0xff]
    %v192 = vld [vmem:[#allocation6 + $0x388] sm:$0xff]
    %v193 = vld [vmem:[#allocation6 + $0x390] sm:$0xff]
    %v194 = vld [vmem:[#allocation6 + $0x398] sm:$0xff]
    %v195 = vld [vmem:[#allocation6 + $0x3a0] sm:$0xff]
    %v196 = vld [vmem:[#allocation6 + $0x3a8] sm:$0xff]
    %v197 = vld [vmem:[#allocation6 + $0x3b0] sm:$0xff]
    %v198 = vld [vmem:[#allocation6 + $0x3b8] sm:$0xff]
    %v199 = vld [vmem:[#allocation6 + $0x3c0] sm:$0xff]
    %v200 = vld [vmem:[#allocation6 + $0x3c8] sm:$0xff]
    %v201 = vld [vmem:[#allocation6 + $0x3d0] sm:$0xff]
    %v202 = vld [vmem:[#allocation6 + $0x3d8] sm:$0xff]
    %v203 = vld [vmem:[#allocation6 + $0x3e0] sm:$0xff]
    %v204 = vld [vmem:[#allocation6 + $0x3e8] sm:$0xff]
    %v205 = vld [vmem:[#allocation6 + $0x3f0] sm:$0xff]
    %v206 = vld [vmem:[#allocation6 + $0x3f8] sm:$0xff]
    %v207 = vld [vmem:[#allocation6 + $0x400] sm:$0xff]
    %v208 = vld [vmem:[#allocation6 + $0x408] sm:$0xff]
    %v209 = vld [vmem:[#allocation6 + $0x410] sm:$0xff]
    %v210 = vld [vmem:[#allocation6 + $0x418] sm:$0xff]
    %v211 = vld [vmem:[#allocation6 + $0x420] sm:$0xff]
    %v212 = vld [vmem:[#allocation6 + $0x428] sm:$0xff]
    %v213 = vld [vmem:[#allocation6 + $0x430] sm:$0xff]
    %v214 = vld [vmem:[#allocation6 + $0x438] sm:$0xff]
    %v215 = vld [vmem:[#allocation6 + $0x440] sm:$0xff]
    %v216 = vld [vmem:[#allocation6 + $0x448] sm:$0xff]
    %v217 = vld [vmem:[#allocation6 + $0x450] sm:$0xff]
    %v218 = vld [vmem:[#allocation6 + $0x458] sm:$0xff]
    %v219 = vld [vmem:[#allocation6 + $0x460] sm:$0xff]
    %v220 = vld [vmem:[#allocation6 + $0x468] sm:$0xff]
    %v221 = vld [vmem:[#allocation6 + $0x470] sm:$0xff]
    %v222 = vld [vmem:[#allocation6 + $0x478] sm:$0xff]
    %v223 = vld [vmem:[#allocation6 + $0x480] sm:$0xff]
    %v224 = vld [vmem:[#allocation6 + $0x488] sm:$0xff]
    %v225 = vld [vmem:[#allocation6 + $0x490] sm:$0xff]
    %v226 = vld [vmem:[#allocation6 + $0x498] sm:$0xff]
    %v227 = vld [vmem:[#allocation6 + $0x4a0] sm:$0xff]
    %v228 = vld [vmem:[#allocation6 + $0x4a8] sm:$0xff]
    %v229 = vld [vmem:[#allocation6 + $0x4b0] sm:$0xff]
    %v230 = vld [vmem:[#allocation6 + $0x4b8] sm:$0xff]
    %v231 = vld [vmem:[#allocation6 + $0x4c0] sm:$0xff]
    %v232 = vld [vmem:[#allocation6 + $0x4c8] sm:$0xff]
    %v233 = vld [vmem:[#allocation6 + $0x4d0] sm:$0xff]
    %v234 = vld [vmem:[#allocation6 + $0x4d8] sm:$0xff]
    %v235 = vld [vmem:[#allocation6 + $0x4e0] sm:$0xff]
    %v236 = vld [vmem:[#allocation6 + $0x4e8] sm:$0xff]
    %v237 = vld [vmem:[#allocation6 + $0x4f0] sm:$0xff]
    %v238 = vld [vmem:[#allocation6 + $0x4f8] sm:$0xff]
    %v239 = vld [vmem:[#allocation6 + $0x500] sm:$0xff]
    %v240 = vld [vmem:[#allocation6 + $0x508] sm:$0xff]
    %v241 = vld [vmem:[#allocation6 + $0x510] sm:$0xff]
    %v242 = vld [vmem:[#allocation6 + $0x518] sm:$0xff]
    %v243 = vld [vmem:[#allocation6 + $0x520] sm:$0xff]
    %v244 = vld [vmem:[#allocation6 + $0x528] sm:$0xff]
    %v245 = vld [vmem:[#allocation6 + $0x530] sm:$0xff]
    %v246 = vld [vmem:[#allocation6 + $0x538] sm:$0xff]
    %v247 = vld [vmem:[#allocation6 + $0x540] sm:$0xff]
    %v248 = vld [vmem:[#allocation6 + $0x548] sm:$0xff]
    %v249 = vld [vmem:[#allocation6 + $0x550] sm:$0xff]
    %v250 = vld [vmem:[#allocation6 + $0x558] sm:$0xff]
    %v251 = vld [vmem:[#allocation6 + $0x560] sm:$0xff]
    %v252 = vld [vmem:[#allocation6 + $0x568] sm:$0xff]
    %v253 = vld [vmem:[#allocation6 + $0x570] sm:$0xff]
    %v254 = vld [vmem:[#allocation6 + $0x578] sm:$0xff]
    %v255 = vld [vmem:[#allocation6 + $0x580] sm:$0xff]
    %v256 = vld [vmem:[#allocation6 + $0x588] sm:$0xff]
    %v257 = vld [vmem:[#allocation6 + $0x590] sm:$0xff]
    %v258 = vld [vmem:[#allocation6 + $0x598] sm:$0xff]
    %v259 = vld [vmem:[#allocation6 + $0x5a0] sm:$0xff]
    %v260 = vld [vmem:[#allocation6 + $0x5a8] sm:$0xff]
    %v261 = vld [vmem:[#allocation6 + $0x5b0] sm:$0xff]
    %v262 = vld [vmem:[#allocation6 + $0x5b8] sm:$0xff]
    %v263 = vld [vmem:[#allocation6 + $0x5c0] sm:$0xff]
    %v264 = vld [vmem:[#allocation6 + $0x5c8] sm:$0xff]
    %v265 = vld [vmem:[#allocation6 + $0x5d0] sm:$0xff]
    %v266 = vld [vmem:[#allocation6 + $0x5d8] sm:$0xff]
    %v267 = vld [vmem:[#allocation6 + $0x5e0] sm:$0xff]
    %v268 = vld [vmem:[#allocation6 + $0x5e8] sm:$0xff]
    %v269 = vld [vmem:[#allocation6 + $0x5f0] sm:$0xff]
    %v270 = vld [vmem:[#allocation6 + $0x5f8] sm:$0xff]
    %v271 = vld [vmem:[#allocation6 + $0x600] sm:$0xff]
    %v272 = vld [vmem:[#allocation6 + $0x608] sm:$0xff]
    %v273 = vld [vmem:[#allocation6 + $0x610] sm:$0xff]
    %v274 = vld [vmem:[#allocation6 + $0x618] sm:$0xff]
    %v275 = vld [vmem:[#allocation6 + $0x620] sm:$0xff]
    %v276 = vld [vmem:[#allocation6 + $0x628] sm:$0xff]
    %v277 = vld [vmem:[#allocation6 + $0x630] sm:$0xff]
    %v278 = vld [vmem:[#allocation6 + $0x638] sm:$0xff]
    %v279 = vld [vmem:[#allocation6 + $0x640] sm:$0xff]
    %v280 = vld [vmem:[#allocation6 + $0x648] sm:$0xff]
    %v281 = vld [vmem:[#allocation6 + $0x650] sm:$0xff]
    %v282 = vld [vmem:[#allocation6 + $0x658] sm:$0xff]
    %v283 = vld [vmem:[#allocation6 + $0x660] sm:$0xff]
    %v284 = vld [vmem:[#allocation6 + $0x668] sm:$0xff]
    %v285 = vld [vmem:[#allocation6 + $0x670] sm:$0xff]
    %v286 = vld [vmem:[#allocation6 + $0x678] sm:$0xff]
    %v287 = vld [vmem:[#allocation6 + $0x680] sm:$0xff]
    %v288 = vld [vmem:[#allocation6 + $0x688] sm:$0xff]
    %v289 = vld [vmem:[#allocation6 + $0x690] sm:$0xff]
    %v290 = vld [vmem:[#allocation6 + $0x698] sm:$0xff]
    %v291 = vld [vmem:[#allocation6 + $0x6a0] sm:$0xff]
    %v292 = vld [vmem:[#allocation6 + $0x6a8] sm:$0xff]
    %v293 = vld [vmem:[#allocation6 + $0x6b0] sm:$0xff]
    %v294 = vld [vmem:[#allocation6 + $0x6b8] sm:$0xff]
    %v295 = vld [vmem:[#allocation6 + $0x6c0] sm:$0xff]
    %v296 = vld [vmem:[#allocation6 + $0x6c8] sm:$0xff]
    %v297 = vld [vmem:[#allocation6 + $0x6d0] sm:$0xff]
    %v298 = vld [vmem:[#allocation6 + $0x6d8] sm:$0xff]
    %v299 = vld [vmem:[#allocation6 + $0x6e0] sm:$0xff]
    %v300 = vld [vmem:[#allocation6 + $0x6e8] sm:$0xff]
    %v301 = vld [vmem:[#allocation6 + $0x6f0] sm:$0xff]
    %v302 = vld [vmem:[#allocation6 + $0x6f8] sm:$0xff]
    %v303 = vld [vmem:[%s2] sm:$0xf]
    %v305 = vlaneseq
    %v306 = vshrl.u32 %v305, 7
    %v307 = vsub.s32 0, %v306
    %v308 = vrot.slane %v303, %v307
    %v309 = vlaneseq
    %v310 = vshrl.u32 %v309, 7
    %v311 = vsub.s32 1, %v310
    %v312 = vrot.slane %v303, %v311
    %v313 = vlaneseq
    %v314 = vshrl.u32 %v313, 7
    %v315 = vsub.s32 2, %v314
    %v316 = vrot.slane %v303, %v315
    %v317 = vlaneseq
    %v318 = vshrl.u32 %v317, 7
    %v319 = vsub.s32 3, %v318
    %v320 = vrot.slane %v303, %v319
    %v333 = vunpack.c.l.b16 %v71
    %v334 = vunpack.c.h.b16 %v71
    %v335 = vunpack.c.l.b16 %v72
    %v336 = vunpack.c.h.b16 %v72
    %v337 = vunpack.c.l.b16 %v73
    %v338 = vunpack.c.h.b16 %v73
    %v339 = vunpack.c.l.b16 %v74
    %v340 = vunpack.c.l.b16 %v75
    %v341 = vunpack.c.h.b16 %v75
    %v342 = vunpack.c.l.b16 %v76
    %v343 = vunpack.c.h.b16 %v76
    %v344 = vunpack.c.l.b16 %v77
    %v345 = vunpack.c.h.b16 %v77
    %v346 = vunpack.c.l.b16 %v78
    %v347 = vpack.c.b16 %v340, %v333
    %v348 = vpack.c.b16 %v341, %v334
    %v349 = vpack.c.b16 %v342, %v335
    %v350 = vpack.c.b16 %v343, %v336
    %v351 = vpack.c.b16 %v344, %v337
    %v352 = vpack.c.b16 %v345, %v338
    %v353 = vpack.c.b16 %v346, %v339
    %v585 = vunpack.c.l.b16 %v79
    %v586 = vunpack.c.h.b16 %v79
    %v587 = vunpack.c.l.b16 %v80
    %v588 = vunpack.c.h.b16 %v80
    %v589 = vunpack.c.l.b16 %v81
    %v590 = vunpack.c.h.b16 %v81
    %v591 = vunpack.c.l.b16 %v82
    %v592 = vunpack.c.h.b16 %v82
    %v593 = vunpack.c.l.b16 %v83
    %v594 = vunpack.c.h.b16 %v83
    %v595 = vunpack.c.l.b16 %v84
    %v596 = vunpack.c.h.b16 %v84
    %v597 = vunpack.c.l.b16 %v85
    %v598 = vunpack.c.h.b16 %v85
    %v599 = vunpack.c.l.b16 %v86
    %v600 = vunpack.c.h.b16 %v86
    %v601 = vunpack.c.l.b16 %v87
    %v602 = vunpack.c.h.b16 %v87
    %v603 = vunpack.c.l.b16 %v88
    %v604 = vunpack.c.h.b16 %v88
    %v605 = vunpack.c.l.b16 %v89
    %v606 = vunpack.c.h.b16 %v89
    %v607 = vunpack.c.l.b16 %v90
    %v608 = vunpack.c.h.b16 %v90
    %v609 = vunpack.c.l.b16 %v91
    %v610 = vunpack.c.h.b16 %v91
    %v611 = vunpack.c.l.b16 %v92
    %v612 = vunpack.c.h.b16 %v92
    %v613 = vunpack.c.l.b16 %v93
    %v614 = vunpack.c.h.b16 %v93
    %v615 = vunpack.c.l.b16 %v94
    %v616 = vunpack.c.h.b16 %v94
    %v617 = vunpack.c.l.b16 %v95
    %v618 = vunpack.c.h.b16 %v95
    %v619 = vunpack.c.l.b16 %v96
    %v620 = vunpack.c.h.b16 %v96
    %v621 = vunpack.c.l.b16 %v97
    %v622 = vunpack.c.h.b16 %v97
    %v623 = vunpack.c.l.b16 %v98
    %v624 = vunpack.c.h.b16 %v98
    %v625 = vunpack.c.l.b16 %v99
    %v626 = vunpack.c.h.b16 %v99
    %v627 = vunpack.c.l.b16 %v100
    %v628 = vunpack.c.h.b16 %v100
    %v629 = vunpack.c.l.b16 %v101
    %v630 = vunpack.c.h.b16 %v101
    %v631 = vunpack.c.l.b16 %v102
    %v632 = vunpack.c.h.b16 %v102
    %v633 = vunpack.c.l.b16 %v103
    %v634 = vunpack.c.h.b16 %v103
    %v635 = vunpack.c.l.b16 %v104
    %v636 = vunpack.c.h.b16 %v104
    %v637 = vunpack.c.l.b16 %v105
    %v638 = vunpack.c.h.b16 %v105
    %v639 = vunpack.c.l.b16 %v106
    %v640 = vunpack.c.h.b16 %v106
    %v641 = vunpack.c.l.b16 %v107
    %v642 = vunpack.c.h.b16 %v107
    %v643 = vunpack.c.l.b16 %v108
    %v644 = vunpack.c.h.b16 %v108
    %v645 = vunpack.c.l.b16 %v109
    %v646 = vunpack.c.h.b16 %v109
    %v647 = vunpack.c.l.b16 %v110
    %v648 = vunpack.c.h.b16 %v110
    %v649 = vunpack.c.l.b16 %v111
    %v650 = vunpack.c.h.b16 %v111
    %v651 = vunpack.c.l.b16 %v112
    %v652 = vunpack.c.h.b16 %v112
    %v653 = vunpack.c.l.b16 %v113
    %v654 = vunpack.c.h.b16 %v113
    %v655 = vunpack.c.l.b16 %v114
    %v656 = vunpack.c.h.b16 %v114
    %v657 = vunpack.c.l.b16 %v115
    %v658 = vunpack.c.h.b16 %v115
    %v659 = vunpack.c.l.b16 %v116
    %v660 = vunpack.c.h.b16 %v116
    %v661 = vunpack.c.l.b16 %v117
    %v662 = vunpack.c.h.b16 %v117
    %v663 = vunpack.c.l.b16 %v118
    %v664 = vunpack.c.h.b16 %v118
    %v665 = vunpack.c.l.b16 %v119
    %v666 = vunpack.c.h.b16 %v119
    %v667 = vunpack.c.l.b16 %v120
    %v668 = vunpack.c.h.b16 %v120
    %v669 = vunpack.c.l.b16 %v121
    %v670 = vunpack.c.h.b16 %v121
    %v671 = vunpack.c.l.b16 %v122
    %v672 = vunpack.c.h.b16 %v122
    %v673 = vunpack.c.l.b16 %v123
    %v674 = vunpack.c.h.b16 %v123
    %v675 = vunpack.c.l.b16 %v124
    %v676 = vunpack.c.h.b16 %v124
    %v677 = vunpack.c.l.b16 %v125
    %v678 = vunpack.c.h.b16 %v125
    %v679 = vunpack.c.l.b16 %v126
    %v680 = vunpack.c.h.b16 %v126
    %v681 = vunpack.c.l.b16 %v127
    %v682 = vunpack.c.h.b16 %v127
    %v683 = vunpack.c.l.b16 %v128
    %v684 = vunpack.c.h.b16 %v128
    %v685 = vunpack.c.l.b16 %v129
    %v686 = vunpack.c.h.b16 %v129
    %v687 = vunpack.c.l.b16 %v130
    %v688 = vunpack.c.h.b16 %v130
    %v689 = vunpack.c.l.b16 %v131
    %v690 = vunpack.c.h.b16 %v131
    %v691 = vunpack.c.l.b16 %v132
    %v692 = vunpack.c.h.b16 %v132
    %v693 = vunpack.c.l.b16 %v133
    %v694 = vunpack.c.h.b16 %v133
    %v695 = vunpack.c.l.b16 %v134
    %v696 = vunpack.c.h.b16 %v134
    %v697 = vunpack.c.l.b16 %v135
    %v698 = vunpack.c.h.b16 %v135
    %v699 = vunpack.c.l.b16 %v136
    %v700 = vunpack.c.h.b16 %v136
    %v701 = vunpack.c.l.b16 %v137
    %v702 = vunpack.c.h.b16 %v137
    %v703 = vunpack.c.l.b16 %v138
    %v704 = vunpack.c.h.b16 %v138
    %v705 = vunpack.c.l.b16 %v139
    %v706 = vunpack.c.h.b16 %v139
    %v707 = vunpack.c.l.b16 %v140
    %v708 = vunpack.c.h.b16 %v140
    %v709 = vunpack.c.l.b16 %v141
    %v710 = vunpack.c.h.b16 %v141
    %v711 = vunpack.c.l.b16 %v142
    %v712 = vunpack.c.h.b16 %v142
    %v713 = vunpack.c.l.b16 %v143
    %v714 = vunpack.c.h.b16 %v143
    %v715 = vunpack.c.l.b16 %v144
    %v716 = vunpack.c.h.b16 %v144
    %v717 = vunpack.c.l.b16 %v145
    %v718 = vunpack.c.h.b16 %v145
    %v719 = vunpack.c.l.b16 %v146
    %v720 = vunpack.c.h.b16 %v146
    %v721 = vunpack.c.l.b16 %v147
    %v722 = vunpack.c.h.b16 %v147
    %v723 = vunpack.c.l.b16 %v148
    %v724 = vunpack.c.h.b16 %v148
    %v725 = vunpack.c.l.b16 %v149
    %v726 = vunpack.c.h.b16 %v149
    %v727 = vunpack.c.l.b16 %v150
    %v728 = vunpack.c.h.b16 %v150
    %v729 = vunpack.c.l.b16 %v151
    %v730 = vunpack.c.h.b16 %v151
    %v731 = vunpack.c.l.b16 %v152
    %v732 = vunpack.c.h.b16 %v152
    %v733 = vunpack.c.l.b16 %v153
    %v734 = vunpack.c.h.b16 %v153
    %v735 = vunpack.c.l.b16 %v154
    %v736 = vunpack.c.h.b16 %v154
    %v737 = vunpack.c.l.b16 %v155
    %v738 = vunpack.c.h.b16 %v155
    %v739 = vunpack.c.l.b16 %v156
    %v740 = vunpack.c.h.b16 %v156
    %v741 = vunpack.c.l.b16 %v157
    %v742 = vunpack.c.h.b16 %v157
    %v743 = vunpack.c.l.b16 %v158
    %v744 = vunpack.c.h.b16 %v158
    %v745 = vunpack.c.l.b16 %v159
    %v746 = vunpack.c.h.b16 %v159
    %v747 = vunpack.c.l.b16 %v160
    %v748 = vunpack.c.h.b16 %v160
    %v749 = vunpack.c.l.b16 %v161
    %v750 = vunpack.c.h.b16 %v161
    %v751 = vunpack.c.l.b16 %v162
    %v752 = vunpack.c.h.b16 %v162
    %v753 = vunpack.c.l.b16 %v163
    %v754 = vunpack.c.h.b16 %v163
    %v755 = vunpack.c.l.b16 %v164
    %v756 = vunpack.c.h.b16 %v164
    %v757 = vunpack.c.l.b16 %v165
    %v758 = vunpack.c.h.b16 %v165
    %v759 = vunpack.c.l.b16 %v166
    %v760 = vunpack.c.h.b16 %v166
    %v761 = vunpack.c.l.b16 %v167
    %v762 = vunpack.c.h.b16 %v167
    %v763 = vunpack.c.l.b16 %v168
    %v764 = vunpack.c.h.b16 %v168
    %v765 = vunpack.c.l.b16 %v169
    %v766 = vunpack.c.h.b16 %v169
    %v767 = vunpack.c.l.b16 %v170
    %v768 = vunpack.c.h.b16 %v170
    %v769 = vunpack.c.l.b16 %v171
    %v770 = vunpack.c.h.b16 %v171
    %v771 = vunpack.c.l.b16 %v172
    %v772 = vunpack.c.h.b16 %v172
    %v773 = vunpack.c.l.b16 %v173
    %v774 = vunpack.c.h.b16 %v173
    %v775 = vunpack.c.l.b16 %v174
    %v776 = vunpack.c.h.b16 %v174
    %v777 = vunpack.c.l.b16 %v175
    %v778 = vunpack.c.h.b16 %v175
    %v779 = vunpack.c.l.b16 %v176
    %v780 = vunpack.c.h.b16 %v176
    %v781 = vunpack.c.l.b16 %v177
    %v782 = vunpack.c.h.b16 %v177
    %v783 = vunpack.c.l.b16 %v178
    %v784 = vunpack.c.h.b16 %v178
    %v785 = vunpack.c.l.b16 %v179
    %v786 = vunpack.c.h.b16 %v179
    %v787 = vunpack.c.l.b16 %v180
    %v788 = vunpack.c.h.b16 %v180
    %v789 = vunpack.c.l.b16 %v181
    %v790 = vunpack.c.h.b16 %v181
    %v791 = vunpack.c.l.b16 %v182
    %v792 = vunpack.c.h.b16 %v182
    %v793 = vunpack.c.l.b16 %v183
    %v794 = vunpack.c.h.b16 %v183
    %v795 = vunpack.c.l.b16 %v184
    %v796 = vunpack.c.h.b16 %v184
    %v797 = vunpack.c.l.b16 %v185
    %v798 = vunpack.c.h.b16 %v185
    %v799 = vunpack.c.l.b16 %v186
    %v800 = vunpack.c.h.b16 %v186
    %v801 = vunpack.c.l.b16 %v187
    %v802 = vunpack.c.h.b16 %v187
    %v803 = vunpack.c.l.b16 %v188
    %v804 = vunpack.c.h.b16 %v188
    %v805 = vunpack.c.l.b16 %v189
    %v806 = vunpack.c.h.b16 %v189
    %v807 = vunpack.c.l.b16 %v190
    %v808 = vunpack.c.h.b16 %v190
    %v809 = vunpack.c.l.b16 %v191
    %v810 = vunpack.c.h.b16 %v191
    %v811 = vunpack.c.l.b16 %v192
    %v812 = vunpack.c.h.b16 %v192
    %v813 = vunpack.c.l.b16 %v193
    %v814 = vunpack.c.h.b16 %v193
    %v815 = vunpack.c.l.b16 %v194
    %v816 = vunpack.c.h.b16 %v194
    %v817 = vunpack.c.l.b16 %v195
    %v818 = vunpack.c.h.b16 %v195
    %v819 = vunpack.c.l.b16 %v196
    %v820 = vunpack.c.h.b16 %v196
    %v821 = vunpack.c.l.b16 %v197
    %v822 = vunpack.c.h.b16 %v197
    %v823 = vunpack.c.l.b16 %v198
    %v824 = vunpack.c.h.b16 %v198
    %v825 = vunpack.c.l.b16 %v199
    %v826 = vunpack.c.h.b16 %v199
    %v827 = vunpack.c.l.b16 %v200
    %v828 = vunpack.c.h.b16 %v200
    %v829 = vunpack.c.l.b16 %v201
    %v830 = vunpack.c.h.b16 %v201
    %v831 = vunpack.c.l.b16 %v202
    %v832 = vunpack.c.h.b16 %v202
    %v833 = vunpack.c.l.b16 %v203
    %v834 = vunpack.c.h.b16 %v203
    %v835 = vunpack.c.l.b16 %v204
    %v836 = vunpack.c.h.b16 %v204
    %v837 = vunpack.c.l.b16 %v205
    %v838 = vunpack.c.h.b16 %v205
    %v839 = vunpack.c.l.b16 %v206
    %v840 = vunpack.c.h.b16 %v206
    %v841 = vunpack.c.l.b16 %v207
    %v842 = vunpack.c.h.b16 %v207
    %v843 = vunpack.c.l.b16 %v208
    %v844 = vunpack.c.h.b16 %v208
    %v845 = vunpack.c.l.b16 %v209
    %v846 = vunpack.c.h.b16 %v209
    %v847 = vunpack.c.l.b16 %v210
    %v848 = vunpack.c.h.b16 %v210
    %v849 = vunpack.c.l.b16 %v211
    %v850 = vunpack.c.h.b16 %v211
    %v851 = vunpack.c.l.b16 %v212
    %v852 = vunpack.c.h.b16 %v212
    %v853 = vunpack.c.l.b16 %v213
    %v854 = vunpack.c.h.b16 %v213
    %v855 = vunpack.c.l.b16 %v214
    %v856 = vunpack.c.h.b16 %v214
    %v857 = vunpack.c.l.b16 %v215
    %v858 = vunpack.c.h.b16 %v215
    %v859 = vunpack.c.l.b16 %v216
    %v860 = vunpack.c.h.b16 %v216
    %v861 = vunpack.c.l.b16 %v217
    %v862 = vunpack.c.h.b16 %v217
    %v863 = vunpack.c.l.b16 %v218
    %v864 = vunpack.c.h.b16 %v218
    %v865 = vunpack.c.l.b16 %v219
    %v866 = vunpack.c.h.b16 %v219
    %v867 = vunpack.c.l.b16 %v220
    %v868 = vunpack.c.h.b16 %v220
    %v869 = vunpack.c.l.b16 %v221
    %v870 = vunpack.c.h.b16 %v221
    %v871 = vunpack.c.l.b16 %v222
    %v872 = vunpack.c.h.b16 %v222
    %v873 = vunpack.c.l.b16 %v223
    %v874 = vunpack.c.h.b16 %v223
    %v875 = vunpack.c.l.b16 %v224
    %v876 = vunpack.c.h.b16 %v224
    %v877 = vunpack.c.l.b16 %v225
    %v878 = vunpack.c.h.b16 %v225
    %v879 = vunpack.c.l.b16 %v226
    %v880 = vunpack.c.h.b16 %v226
    %v881 = vunpack.c.l.b16 %v227
    %v882 = vunpack.c.h.b16 %v227
    %v883 = vunpack.c.l.b16 %v228
    %v884 = vunpack.c.h.b16 %v228
    %v885 = vunpack.c.l.b16 %v229
    %v886 = vunpack.c.h.b16 %v229
    %v887 = vunpack.c.l.b16 %v230
    %v888 = vunpack.c.h.b16 %v230
    %v889 = vunpack.c.l.b16 %v231
    %v890 = vunpack.c.h.b16 %v231
    %v891 = vunpack.c.l.b16 %v232
    %v892 = vunpack.c.h.b16 %v232
    %v893 = vunpack.c.l.b16 %v233
    %v894 = vunpack.c.h.b16 %v233
    %v895 = vunpack.c.l.b16 %v234
    %v896 = vunpack.c.h.b16 %v234
    %v897 = vunpack.c.l.b16 %v235
    %v898 = vunpack.c.h.b16 %v235
    %v899 = vunpack.c.l.b16 %v236
    %v900 = vunpack.c.h.b16 %v236
    %v901 = vunpack.c.l.b16 %v237
    %v902 = vunpack.c.h.b16 %v237
    %v903 = vunpack.c.l.b16 %v238
    %v904 = vunpack.c.h.b16 %v238
    %v905 = vunpack.c.l.b16 %v239
    %v906 = vunpack.c.h.b16 %v239
    %v907 = vunpack.c.l.b16 %v240
    %v908 = vunpack.c.h.b16 %v240
    %v909 = vunpack.c.l.b16 %v241
    %v910 = vunpack.c.h.b16 %v241
    %v911 = vunpack.c.l.b16 %v242
    %v912 = vunpack.c.h.b16 %v242
    %v913 = vunpack.c.l.b16 %v243
    %v914 = vunpack.c.h.b16 %v243
    %v915 = vunpack.c.l.b16 %v244
    %v916 = vunpack.c.h.b16 %v244
    %v917 = vunpack.c.l.b16 %v245
    %v918 = vunpack.c.h.b16 %v245
    %v919 = vunpack.c.l.b16 %v246
    %v920 = vunpack.c.h.b16 %v246
    %v921 = vunpack.c.l.b16 %v247
    %v922 = vunpack.c.h.b16 %v247
    %v923 = vunpack.c.l.b16 %v248
    %v924 = vunpack.c.h.b16 %v248
    %v925 = vunpack.c.l.b16 %v249
    %v926 = vunpack.c.h.b16 %v249
    %v927 = vunpack.c.l.b16 %v250
    %v928 = vunpack.c.h.b16 %v250
    %v929 = vunpack.c.l.b16 %v251
    %v930 = vunpack.c.h.b16 %v251
    %v931 = vunpack.c.l.b16 %v252
    %v932 = vunpack.c.h.b16 %v252
    %v933 = vunpack.c.l.b16 %v253
    %v934 = vunpack.c.h.b16 %v253
    %v935 = vunpack.c.l.b16 %v254
    %v936 = vunpack.c.h.b16 %v254
    %v937 = vunpack.c.l.b16 %v255
    %v938 = vunpack.c.h.b16 %v255
    %v939 = vunpack.c.l.b16 %v256
    %v940 = vunpack.c.h.b16 %v256
    %v941 = vunpack.c.l.b16 %v257
    %v942 = vunpack.c.h.b16 %v257
    %v943 = vunpack.c.l.b16 %v258
    %v944 = vunpack.c.h.b16 %v258
    %v945 = vunpack.c.l.b16 %v259
    %v946 = vunpack.c.h.b16 %v259
    %v947 = vunpack.c.l.b16 %v260
    %v948 = vunpack.c.h.b16 %v260
    %v949 = vunpack.c.l.b16 %v261
    %v950 = vunpack.c.h.b16 %v261
    %v951 = vunpack.c.l.b16 %v262
    %v952 = vunpack.c.h.b16 %v262
    %v953 = vunpack.c.l.b16 %v263
    %v954 = vunpack.c.h.b16 %v263
    %v955 = vunpack.c.l.b16 %v264
    %v956 = vunpack.c.h.b16 %v264
    %v957 = vunpack.c.l.b16 %v265
    %v958 = vunpack.c.h.b16 %v265
    %v959 = vunpack.c.l.b16 %v266
    %v960 = vunpack.c.h.b16 %v266
    %v961 = vunpack.c.l.b16 %v267
    %v962 = vunpack.c.h.b16 %v267
    %v963 = vunpack.c.l.b16 %v268
    %v964 = vunpack.c.h.b16 %v268
    %v965 = vunpack.c.l.b16 %v269
    %v966 = vunpack.c.h.b16 %v269
    %v967 = vunpack.c.l.b16 %v270
    %v968 = vunpack.c.h.b16 %v270
    %v969 = vunpack.c.l.b16 %v271
    %v970 = vunpack.c.h.b16 %v271
    %v971 = vunpack.c.l.b16 %v272
    %v972 = vunpack.c.h.b16 %v272
    %v973 = vunpack.c.l.b16 %v273
    %v974 = vunpack.c.h.b16 %v273
    %v975 = vunpack.c.l.b16 %v274
    %v976 = vunpack.c.h.b16 %v274
    %v977 = vunpack.c.l.b16 %v275
    %v978 = vunpack.c.h.b16 %v275
    %v979 = vunpack.c.l.b16 %v276
    %v980 = vunpack.c.h.b16 %v276
    %v981 = vunpack.c.l.b16 %v277
    %v982 = vunpack.c.h.b16 %v277
    %v983 = vunpack.c.l.b16 %v278
    %v984 = vunpack.c.h.b16 %v278
    %v985 = vunpack.c.l.b16 %v279
    %v986 = vunpack.c.h.b16 %v279
    %v987 = vunpack.c.l.b16 %v280
    %v988 = vunpack.c.h.b16 %v280
    %v989 = vunpack.c.l.b16 %v281
    %v990 = vunpack.c.h.b16 %v281
    %v991 = vunpack.c.l.b16 %v282
    %v992 = vunpack.c.h.b16 %v282
    %v993 = vunpack.c.l.b16 %v283
    %v994 = vunpack.c.h.b16 %v283
    %v995 = vunpack.c.l.b16 %v284
    %v996 = vunpack.c.h.b16 %v284
    %v997 = vunpack.c.l.b16 %v285
    %v998 = vunpack.c.h.b16 %v285
    %v999 = vunpack.c.l.b16 %v286
    %v1000 = vunpack.c.h.b16 %v286
    %v1001 = vunpack.c.l.b16 %v287
    %v1002 = vunpack.c.h.b16 %v287
    %v1003 = vunpack.c.l.b16 %v288
    %v1004 = vunpack.c.h.b16 %v288
    %v1005 = vunpack.c.l.b16 %v289
    %v1006 = vunpack.c.h.b16 %v289
    %v1007 = vunpack.c.l.b16 %v290
    %v1008 = vunpack.c.h.b16 %v290
    %v1009 = vunpack.c.l.b16 %v291
    %v1010 = vunpack.c.h.b16 %v291
    %v1011 = vunpack.c.l.b16 %v292
    %v1012 = vunpack.c.h.b16 %v292
    %v1013 = vunpack.c.l.b16 %v293
    %v1014 = vunpack.c.h.b16 %v293
    %v1015 = vunpack.c.l.b16 %v294
    %v1016 = vunpack.c.h.b16 %v294
    %v1017 = vunpack.c.l.b16 %v295
    %v1018 = vunpack.c.h.b16 %v295
    %v1019 = vunpack.c.l.b16 %v296
    %v1020 = vunpack.c.h.b16 %v296
    %v1021 = vunpack.c.l.b16 %v297
    %v1022 = vunpack.c.h.b16 %v297
    %v1023 = vunpack.c.l.b16 %v298
    %v1024 = vunpack.c.h.b16 %v298
    %v1025 = vunpack.c.l.b16 %v299
    %v1026 = vunpack.c.h.b16 %v299
    %v1027 = vunpack.c.l.b16 %v300
    %v1028 = vunpack.c.h.b16 %v300
    %v1029 = vunpack.c.l.b16 %v301
    %v1030 = vunpack.c.h.b16 %v301
    %v1031 = vunpack.c.l.b16 %v302
    %v1032 = vunpack.c.h.b16 %v302
    %v1033 = vpack.c.b16 %v589, %v585
    %v1034 = vpack.c.b16 %v590, %v586
    %v1035 = vpack.c.b16 %v591, %v587
    %v1036 = vpack.c.b16 %v592, %v588
    %v1037 = vpack.c.b16 %v597, %v593
    %v1038 = vpack.c.b16 %v598, %v594
    %v1039 = vpack.c.b16 %v599, %v595
    %v1040 = vpack.c.b16 %v600, %v596
    %v1041 = vpack.c.b16 %v605, %v601
    %v1042 = vpack.c.b16 %v606, %v602
    %v1043 = vpack.c.b16 %v607, %v603
    %v1044 = vpack.c.b16 %v608, %v604
    %v1045 = vpack.c.b16 %v613, %v609
    %v1046 = vpack.c.b16 %v614, %v610
    %v1047 = vpack.c.b16 %v615, %v611
    %v1048 = vpack.c.b16 %v616, %v612
    %v1049 = vpack.c.b16 %v621, %v617
    %v1050 = vpack.c.b16 %v622, %v618
    %v1051 = vpack.c.b16 %v623, %v619
    %v1052 = vpack.c.b16 %v624, %v620
    %v1053 = vpack.c.b16 %v629, %v625
    %v1054 = vpack.c.b16 %v630, %v626
    %v1055 = vpack.c.b16 %v631, %v627
    %v1056 = vpack.c.b16 %v632, %v628
    %v1057 = vpack.c.b16 %v637, %v633
    %v1058 = vpack.c.b16 %v638, %v634
    %v1059 = vpack.c.b16 %v639, %v635
    %v1060 = vpack.c.b16 %v640, %v636
    %v1061 = vpack.c.b16 %v645, %v641
    %v1062 = vpack.c.b16 %v646, %v642
    %v1063 = vpack.c.b16 %v647, %v643
    %v1064 = vpack.c.b16 %v648, %v644
    %v1065 = vpack.c.b16 %v653, %v649
    %v1066 = vpack.c.b16 %v654, %v650
    %v1067 = vpack.c.b16 %v655, %v651
    %v1068 = vpack.c.b16 %v656, %v652
    %v1069 = vpack.c.b16 %v661, %v657
    %v1070 = vpack.c.b16 %v662, %v658
    %v1071 = vpack.c.b16 %v663, %v659
    %v1072 = vpack.c.b16 %v664, %v660
    %v1073 = vpack.c.b16 %v669, %v665
    %v1074 = vpack.c.b16 %v670, %v666
    %v1075 = vpack.c.b16 %v671, %v667
    %v1076 = vpack.c.b16 %v672, %v668
    %v1077 = vpack.c.b16 %v677, %v673
    %v1078 = vpack.c.b16 %v678, %v674
    %v1079 = vpack.c.b16 %v679, %v675
    %v1080 = vpack.c.b16 %v680, %v676
    %v1081 = vpack.c.b16 %v685, %v681
    %v1082 = vpack.c.b16 %v686, %v682
    %v1083 = vpack.c.b16 %v687, %v683
    %v1084 = vpack.c.b16 %v688, %v684
    %v1085 = vpack.c.b16 %v693, %v689
    %v1086 = vpack.c.b16 %v694, %v690
    %v1087 = vpack.c.b16 %v695, %v691
    %v1088 = vpack.c.b16 %v696, %v692
    %v1089 = vpack.c.b16 %v701, %v697
    %v1090 = vpack.c.b16 %v702, %v698
    %v1091 = vpack.c.b16 %v703, %v699
    %v1092 = vpack.c.b16 %v704, %v700
    %v1093 = vpack.c.b16 %v709, %v705
    %v1094 = vpack.c.b16 %v710, %v706
    %v1095 = vpack.c.b16 %v711, %v707
    %v1096 = vpack.c.b16 %v712, %v708
    %v1097 = vpack.c.b16 %v717, %v713
    %v1098 = vpack.c.b16 %v718, %v714
    %v1099 = vpack.c.b16 %v719, %v715
    %v1100 = vpack.c.b16 %v720, %v716
    %v1101 = vpack.c.b16 %v725, %v721
    %v1102 = vpack.c.b16 %v726, %v722
    %v1103 = vpack.c.b16 %v727, %v723
    %v1104 = vpack.c.b16 %v728, %v724
    %v1105 = vpack.c.b16 %v733, %v729
    %v1106 = vpack.c.b16 %v734, %v730
    %v1107 = vpack.c.b16 %v735, %v731
    %v1108 = vpack.c.b16 %v736, %v732
    %v1109 = vpack.c.b16 %v741, %v737
    %v1110 = vpack.c.b16 %v742, %v738
    %v1111 = vpack.c.b16 %v743, %v739
    %v1112 = vpack.c.b16 %v744, %v740
    %v1113 = vpack.c.b16 %v749, %v745
    %v1114 = vpack.c.b16 %v750, %v746
    %v1115 = vpack.c.b16 %v751, %v747
    %v1116 = vpack.c.b16 %v752, %v748
    %v1117 = vpack.c.b16 %v757, %v753
    %v1118 = vpack.c.b16 %v758, %v754
    %v1119 = vpack.c.b16 %v759, %v755
    %v1120 = vpack.c.b16 %v760, %v756
    %v1121 = vpack.c.b16 %v765, %v761
    %v1122 = vpack.c.b16 %v766, %v762
    %v1123 = vpack.c.b16 %v767, %v763
    %v1124 = vpack.c.b16 %v768, %v764
    %v1125 = vpack.c.b16 %v773, %v769
    %v1126 = vpack.c.b16 %v774, %v770
    %v1127 = vpack.c.b16 %v775, %v771
    %v1128 = vpack.c.b16 %v776, %v772
    %v1129 = vpack.c.b16 %v781, %v777
    %v1130 = vpack.c.b16 %v782, %v778
    %v1131 = vpack.c.b16 %v783, %v779
    %v1132 = vpack.c.b16 %v784, %v780
    %v1133 = vpack.c.b16 %v789, %v785
    %v1134 = vpack.c.b16 %v790, %v786
    %v1135 = vpack.c.b16 %v791, %v787
    %v1136 = vpack.c.b16 %v792, %v788
    %v1137 = vpack.c.b16 %v797, %v793
    %v1138 = vpack.c.b16 %v798, %v794
    %v1139 = vpack.c.b16 %v799, %v795
    %v1140 = vpack.c.b16 %v800, %v796
    %v1141 = vpack.c.b16 %v805, %v801
    %v1142 = vpack.c.b16 %v806, %v802
    %v1143 = vpack.c.b16 %v807, %v803
    %v1144 = vpack.c.b16 %v808, %v804
    %v1145 = vpack.c.b16 %v813, %v809
    %v1146 = vpack.c.b16 %v814, %v810
    %v1147 = vpack.c.b16 %v815, %v811
    %v1148 = vpack.c.b16 %v816, %v812
    %v1149 = vpack.c.b16 %v821, %v817
    %v1150 = vpack.c.b16 %v822, %v818
    %v1151 = vpack.c.b16 %v823, %v819
    %v1152 = vpack.c.b16 %v824, %v820
    %v1153 = vpack.c.b16 %v829, %v825
    %v1154 = vpack.c.b16 %v830, %v826
    %v1155 = vpack.c.b16 %v831, %v827
    %v1156 = vpack.c.b16 %v832, %v828
    %v1157 = vpack.c.b16 %v837, %v833
    %v1158 = vpack.c.b16 %v838, %v834
    %v1159 = vpack.c.b16 %v839, %v835
    %v1160 = vpack.c.b16 %v840, %v836
    %v1161 = vpack.c.b16 %v845, %v841
    %v1162 = vpack.c.b16 %v846, %v842
    %v1163 = vpack.c.b16 %v847, %v843
    %v1164 = vpack.c.b16 %v848, %v844
    %v1165 = vpack.c.b16 %v853, %v849
    %v1166 = vpack.c.b16 %v854, %v850
    %v1167 = vpack.c.b16 %v855, %v851
    %v1168 = vpack.c.b16 %v856, %v852
    %v1169 = vpack.c.b16 %v861, %v857
    %v1170 = vpack.c.b16 %v862, %v858
    %v1171 = vpack.c.b16 %v863, %v859
    %v1172 = vpack.c.b16 %v864, %v860
    %v1173 = vpack.c.b16 %v869, %v865
    %v1174 = vpack.c.b16 %v870, %v866
    %v1175 = vpack.c.b16 %v871, %v867
    %v1176 = vpack.c.b16 %v872, %v868
    %v1177 = vpack.c.b16 %v877, %v873
    %v1178 = vpack.c.b16 %v878, %v874
    %v1179 = vpack.c.b16 %v879, %v875
    %v1180 = vpack.c.b16 %v880, %v876
    %v1181 = vpack.c.b16 %v885, %v881
    %v1182 = vpack.c.b16 %v886, %v882
    %v1183 = vpack.c.b16 %v887, %v883
    %v1184 = vpack.c.b16 %v888, %v884
    %v1185 = vpack.c.b16 %v893, %v889
    %v1186 = vpack.c.b16 %v894, %v890
    %v1187 = vpack.c.b16 %v895, %v891
    %v1188 = vpack.c.b16 %v896, %v892
    %v1189 = vpack.c.b16 %v901, %v897
    %v1190 = vpack.c.b16 %v902, %v898
    %v1191 = vpack.c.b16 %v903, %v899
    %v1192 = vpack.c.b16 %v904, %v900
    %v1193 = vpack.c.b16 %v909, %v905
    %v1194 = vpack.c.b16 %v910, %v906
    %v1195 = vpack.c.b16 %v911, %v907
    %v1196 = vpack.c.b16 %v912, %v908
    %v1197 = vpack.c.b16 %v917, %v913
    %v1198 = vpack.c.b16 %v918, %v914
    %v1199 = vpack.c.b16 %v919, %v915
    %v1200 = vpack.c.b16 %v920, %v916
    %v1201 = vpack.c.b16 %v925, %v921
    %v1202 = vpack.c.b16 %v926, %v922
    %v1203 = vpack.c.b16 %v927, %v923
    %v1204 = vpack.c.b16 %v928, %v924
    %v1205 = vpack.c.b16 %v933, %v929
    %v1206 = vpack.c.b16 %v934, %v930
    %v1207 = vpack.c.b16 %v935, %v931
    %v1208 = vpack.c.b16 %v936, %v932
    %v1209 = vpack.c.b16 %v941, %v937
    %v1210 = vpack.c.b16 %v942, %v938
    %v1211 = vpack.c.b16 %v943, %v939
    %v1212 = vpack.c.b16 %v944, %v940
    %v1213 = vpack.c.b16 %v949, %v945
    %v1214 = vpack.c.b16 %v950, %v946
    %v1215 = vpack.c.b16 %v951, %v947
    %v1216 = vpack.c.b16 %v952, %v948
    %v1217 = vpack.c.b16 %v957, %v953
    %v1218 = vpack.c.b16 %v958, %v954
    %v1219 = vpack.c.b16 %v959, %v955
    %v1220 = vpack.c.b16 %v960, %v956
    %v1221 = vpack.c.b16 %v965, %v961
    %v1222 = vpack.c.b16 %v966, %v962
    %v1223 = vpack.c.b16 %v967, %v963
    %v1224 = vpack.c.b16 %v968, %v964
    %v1225 = vpack.c.b16 %v973, %v969
    %v1226 = vpack.c.b16 %v974, %v970
    %v1227 = vpack.c.b16 %v975, %v971
    %v1228 = vpack.c.b16 %v976, %v972
    %v1229 = vpack.c.b16 %v981, %v977
    %v1230 = vpack.c.b16 %v982, %v978
    %v1231 = vpack.c.b16 %v983, %v979
    %v1232 = vpack.c.b16 %v984, %v980
    %v1233 = vpack.c.b16 %v989, %v985
    %v1234 = vpack.c.b16 %v990, %v986
    %v1235 = vpack.c.b16 %v991, %v987
    %v1236 = vpack.c.b16 %v992, %v988
    %v1237 = vpack.c.b16 %v997, %v993
    %v1238 = vpack.c.b16 %v998, %v994
    %v1239 = vpack.c.b16 %v999, %v995
    %v1240 = vpack.c.b16 %v1000, %v996
    %v1241 = vpack.c.b16 %v1005, %v1001
    %v1242 = vpack.c.b16 %v1006, %v1002
    %v1243 = vpack.c.b16 %v1007, %v1003
    %v1244 = vpack.c.b16 %v1008, %v1004
    %v1245 = vpack.c.b16 %v1013, %v1009
    %v1246 = vpack.c.b16 %v1014, %v1010
    %v1247 = vpack.c.b16 %v1015, %v1011
    %v1248 = vpack.c.b16 %v1016, %v1012
    %v1249 = vpack.c.b16 %v1021, %v1017
    %v1250 = vpack.c.b16 %v1022, %v1018
    %v1251 = vpack.c.b16 %v1023, %v1019
    %v1252 = vpack.c.b16 %v1024, %v1020
    %v1253 = vpack.c.b16 %v1029, %v1025
    %v1254 = vpack.c.b16 %v1030, %v1026
    %v1255 = vpack.c.b16 %v1031, %v1027
    %v1256 = vpack.c.b16 %v1032, %v1028
    %1481 = vmatprep.subr.bf16.mxu0 %v1062
    %1482 = vmatpush1.bf16.msra.mxu0 %v1061
    %1483 = vmatprep.subr.bf16.mxu0 %v1058
    %1484 = vmatpush1.bf16.msra.mxu0 %v1057
    %1485 = vmatprep.subr.bf16.mxu0 %v1054
    %1486 = vmatpush1.bf16.msra.mxu0 %v1053
    %1487 = vmatprep.subr.bf16.mxu0 %v1050
    %1488 = vmatpush1.bf16.msra.mxu0 %v1049
    %1489 = vmatprep.subr.bf16.mxu0 %v1046
    %1490 = vmatpush1.bf16.msra.mxu0 %v1045
    %1491 = vmatprep.subr.bf16.mxu0 %v1042
    %1492 = vmatpush1.bf16.msra.mxu0 %v1041
    %1493 = vmatprep.subr.bf16.mxu0 %v1038
    %1494 = vmatpush1.bf16.msra.mxu0 %v1037
    %1495 = vmatprep.subr.bf16.mxu0 %v1034
    %1496 = vmatpush1.bf16.msra.mxu0 %v1033
    %1497 = vmatprep.subr.bf16.mxu0 %v1094
    %1498 = vmatpush2.bf16.msra.mxu0 %v1093
    %1499 = vmatprep.subr.bf16.mxu0 %v1090
    %1500 = vmatpush2.bf16.msra.mxu0 %v1089
    %1501 = vmatprep.subr.bf16.mxu0 %v1086
    %1502 = vmatpush2.bf16.msra.mxu0 %v1085
    %1503 = vmatprep.subr.bf16.mxu0 %v1082
    %1504 = vmatpush2.bf16.msra.mxu0 %v1081
    %1505 = vmatprep.subr.bf16.mxu0 %v1078
    %1506 = vmatpush2.bf16.msra.mxu0 %v1077
    %1507 = vmatprep.subr.bf16.mxu0 %v1074
    %1508 = vmatpush2.bf16.msra.mxu0 %v1073
    %1509 = vmatprep.subr.bf16.mxu0 %v1070
    %1510 = vmatpush2.bf16.msra.mxu0 %v1069
    %1511 = vmatprep.subr.bf16.mxu0 %v1066
    %1512 = vmatpush2.bf16.msra.mxu0 %v1065
    %1513 = vmatprep.mubr.bf16.mxu0 %v348
    %1514 = vmatmul.mubr.bf16.gmra.mxu0 %v347
    %v1515 = vpop.f32.mrf.mxu0
    %v1516 = vadd.f32 %v308, %v1515
    %v1517 = vpop.f32.mrf.mxu0
    %v1518 = vadd.f32 %v312, %v1517
    %v1519 = vpop.f32.mrf.mxu0
    %v1520 = vadd.f32 %v308, %v1519
    %v1521 = vpop.f32.mrf.mxu0
    %v1522 = vadd.f32 %v312, %v1521
    %1523 = vdwg.mxu0
    %1524 = vmatprep.subr.bf16.mxu0 %v1126
    %1525 = vmatpush1.bf16.msra.mxu0 %v1125
    %1526 = vmatprep.subr.bf16.mxu0 %v1122
    %1527 = vmatpush1.bf16.msra.mxu0 %v1121
    %1528 = vmatprep.subr.bf16.mxu0 %v1118
    %1529 = vmatpush1.bf16.msra.mxu0 %v1117
    %1530 = vmatprep.subr.bf16.mxu0 %v1114
    %1531 = vmatpush1.bf16.msra.mxu0 %v1113
    %1532 = vmatprep.subr.bf16.mxu0 %v1110
    %1533 = vmatpush1.bf16.msra.mxu0 %v1109
    %1534 = vmatprep.subr.bf16.mxu0 %v1106
    %1535 = vmatpush1.bf16.msra.mxu0 %v1105
    %1536 = vmatprep.subr.bf16.mxu0 %v1102
    %1537 = vmatpush1.bf16.msra.mxu0 %v1101
    %1538 = vmatprep.subr.bf16.mxu0 %v1098
    %1539 = vmatpush1.bf16.msra.mxu0 %v1097
    %1540 = vmatprep.subr.bf16.mxu0 %v1158
    %1541 = vmatpush2.bf16.msra.mxu0 %v1157
    %1542 = vmatprep.subr.bf16.mxu0 %v1154
    %1543 = vmatpush2.bf16.msra.mxu0 %v1153
    %1544 = vmatprep.subr.bf16.mxu0 %v1150
    %1545 = vmatpush2.bf16.msra.mxu0 %v1149
    %1546 = vmatprep.subr.bf16.mxu0 %v1146
    %1547 = vmatpush2.bf16.msra.mxu0 %v1145
    %1548 = vmatprep.subr.bf16.mxu0 %v1142
    %1549 = vmatpush2.bf16.msra.mxu0 %v1141
    %1550 = vmatprep.subr.bf16.mxu0 %v1138
    %1551 = vmatpush2.bf16.msra.mxu0 %v1137
    %1552 = vmatprep.subr.bf16.mxu0 %v1134
    %1553 = vmatpush2.bf16.msra.mxu0 %v1133
    %1554 = vmatprep.subr.bf16.mxu0 %v1130
    %1555 = vmatpush2.bf16.msra.mxu0 %v1129
    %1556 = vmatprep.mubr.bf16.mxu0 %v350
    %1557 = vmatmul.mubr.bf16.gmra.mxu0 %v349
    %v1558 = vpop.f32.mrf.mxu0
    %v1559 = vadd.f32 %v1516, %v1558
    %v1560 = vpop.f32.mrf.mxu0
    %v1561 = vadd.f32 %v1518, %v1560
    %v1562 = vpop.f32.mrf.mxu0
    %v1563 = vadd.f32 %v1520, %v1562
    %v1564 = vpop.f32.mrf.mxu0
    %v1565 = vadd.f32 %v1522, %v1564
    %1566 = vdwg.mxu0
    %1567 = vmatprep.subr.bf16.mxu0 %v1190
    %1568 = vmatpush1.bf16.msra.mxu0 %v1189
    %1569 = vmatprep.subr.bf16.mxu0 %v1186
    %1570 = vmatpush1.bf16.msra.mxu0 %v1185
    %1571 = vmatprep.subr.bf16.mxu0 %v1182
    %1572 = vmatpush1.bf16.msra.mxu0 %v1181
    %1573 = vmatprep.subr.bf16.mxu0 %v1178
    %1574 = vmatpush1.bf16.msra.mxu0 %v1177
    %1575 = vmatprep.subr.bf16.mxu0 %v1174
    %1576 = vmatpush1.bf16.msra.mxu0 %v1173
    %1577 = vmatprep.subr.bf16.mxu0 %v1170
    %1578 = vmatpush1.bf16.msra.mxu0 %v1169
    %1579 = vmatprep.subr.bf16.mxu0 %v1166
    %1580 = vmatpush1.bf16.msra.mxu0 %v1165
    %1581 = vmatprep.subr.bf16.mxu0 %v1162
    %1582 = vmatpush1.bf16.msra.mxu0 %v1161
    %1583 = vmatprep.subr.bf16.mxu0 %v1222
    %1584 = vmatpush2.bf16.msra.mxu0 %v1221
    %1585 = vmatprep.subr.bf16.mxu0 %v1218
    %1586 = vmatpush2.bf16.msra.mxu0 %v1217
    %1587 = vmatprep.subr.bf16.mxu0 %v1214
    %1588 = vmatpush2.bf16.msra.mxu0 %v1213
    %1589 = vmatprep.subr.bf16.mxu0 %v1210
    %1590 = vmatpush2.bf16.msra.mxu0 %v1209
    %1591 = vmatprep.subr.bf16.mxu0 %v1206
    %1592 = vmatpush2.bf16.msra.mxu0 %v1205
    %1593 = vmatprep.subr.bf16.mxu0 %v1202
    %1594 = vmatpush2.bf16.msra.mxu0 %v1201
    %1595 = vmatprep.subr.bf16.mxu0 %v1198
    %1596 = vmatpush2.bf16.msra.mxu0 %v1197
    %1597 = vmatprep.subr.bf16.mxu0 %v1194
    %1598 = vmatpush2.bf16.msra.mxu0 %v1193
    %1599 = vmatprep.mubr.bf16.mxu0 %v352
    %1600 = vmatmul.mubr.bf16.gmra.mxu0 %v351
    %v1601 = vpop.f32.mrf.mxu0
    %v1602 = vadd.f32 %v1559, %v1601
    %v1603 = vpop.f32.mrf.mxu0
    %v1604 = vadd.f32 %v1561, %v1603
    %v1605 = vpop.f32.mrf.mxu0
    %v1606 = vadd.f32 %v1563, %v1605
    %v1607 = vpop.f32.mrf.mxu0
    %v1608 = vadd.f32 %v1565, %v1607
    %1609 = vdwg.mxu0
    %1610 = vmatprep.subr.bf16.mxu0 %v1254
    %1611 = vmatpush1.bf16.msra.mxu0 %v1253
    %1612 = vmatprep.subr.bf16.mxu0 %v1250
    %1613 = vmatpush1.bf16.msra.mxu0 %v1249
    %1614 = vmatprep.subr.bf16.mxu0 %v1246
    %1615 = vmatpush1.bf16.msra.mxu0 %v1245
    %1616 = vmatprep.subr.bf16.mxu0 %v1242
    %1617 = vmatpush1.bf16.msra.mxu0 %v1241
    %1618 = vmatprep.subr.bf16.mxu0 %v1238
    %1619 = vmatpush1.bf16.msra.mxu0 %v1237
    %1620 = vmatprep.subr.bf16.mxu0 %v1234
    %1621 = vmatpush1.bf16.msra.mxu0 %v1233
    %1622 = vmatprep.subr.bf16.mxu0 %v1230
    %1623 = vmatpush1.bf16.msra.mxu0 %v1229
    %1624 = vmatprep.subr.bf16.mxu0 %v1226
    %1625 = vmatpush1.bf16.msra.mxu0 %v1225
    %1626 = vmatprep.subr.bf16.mxu0 0
    %1627 = vmatpush2.bf16.msra.mxu0 0
    %1628 = vmatprep.subr.bf16.mxu0 0
    %1629 = vmatpush2.bf16.msra.mxu0 0
    %1630 = vmatprep.subr.bf16.mxu0 0
    %1631 = vmatpush2.bf16.msra.mxu0 0
    %1632 = vmatprep.subr.bf16.mxu0 0
    %1633 = vmatpush2.bf16.msra.mxu0 0
    %1634 = vmatprep.subr.bf16.mxu0 0
    %1635 = vmatpush2.bf16.msra.mxu0 0
    %1636 = vmatprep.subr.bf16.mxu0 0
    %1637 = vmatpush2.bf16.msra.mxu0 0
    %1638 = vmatprep.subr.bf16.mxu0 0
    %1639 = vmatpush2.bf16.msra.mxu0 0
    %1640 = vmatprep.subr.bf16.mxu0 0
    %1641 = vmatpush2.bf16.msra.mxu0 0
    %1642 = vmatprep.mubr.bf16.mxu0 0
    %1643 = vmatmul.mubr.bf16.gmra.mxu0 %v353
    %v1644 = vpop.f32.mrf.mxu0
    %v1645 = vadd.f32 %v1602, %v1644
    %v1646 = vpop.f32.mrf.mxu0
    %v1647 = vadd.f32 %v1604, %v1646
    %v1648 = vpop.f32.mrf.mxu0
    %v1649 = vadd.f32 %v1606, %v1648
    %v1650 = vpop.f32.mrf.mxu0
    %v1651 = vadd.f32 %v1608, %v1650
    %1652 = vdwg.mxu0
    %1653 = vmatprep.subr.bf16.mxu0 %v1064
    %1654 = vmatpush1.bf16.msra.mxu0 %v1063
    %1655 = vmatprep.subr.bf16.mxu0 %v1060
    %1656 = vmatpush1.bf16.msra.mxu0 %v1059
    %1657 = vmatprep.subr.bf16.mxu0 %v1056
    %1658 = vmatpush1.bf16.msra.mxu0 %v1055
    %1659 = vmatprep.subr.bf16.mxu0 %v1052
    %1660 = vmatpush1.bf16.msra.mxu0 %v1051
    %1661 = vmatprep.subr.bf16.mxu0 %v1048
    %1662 = vmatpush1.bf16.msra.mxu0 %v1047
    %1663 = vmatprep.subr.bf16.mxu0 %v1044
    %1664 = vmatpush1.bf16.msra.mxu0 %v1043
    %1665 = vmatprep.subr.bf16.mxu0 %v1040
    %1666 = vmatpush1.bf16.msra.mxu0 %v1039
    %1667 = vmatprep.subr.bf16.mxu0 %v1036
    %1668 = vmatpush1.bf16.msra.mxu0 %v1035
    %1669 = vmatprep.subr.bf16.mxu0 %v1096
    %1670 = vmatpush2.bf16.msra.mxu0 %v1095
    %1671 = vmatprep.subr.bf16.mxu0 %v1092
    %1672 = vmatpush2.bf16.msra.mxu0 %v1091
    %1673 = vmatprep.subr.bf16.mxu0 %v1088
    %1674 = vmatpush2.bf16.msra.mxu0 %v1087
    %1675 = vmatprep.subr.bf16.mxu0 %v1084
    %1676 = vmatpush2.bf16.msra.mxu0 %v1083
    %1677 = vmatprep.subr.bf16.mxu0 %v1080
    %1678 = vmatpush2.bf16.msra.mxu0 %v1079
    %1679 = vmatprep.subr.bf16.mxu0 %v1076
    %1680 = vmatpush2.bf16.msra.mxu0 %v1075
    %1681 = vmatprep.subr.bf16.mxu0 %v1072
    %1682 = vmatpush2.bf16.msra.mxu0 %v1071
    %1683 = vmatprep.subr.bf16.mxu0 %v1068
    %1684 = vmatpush2.bf16.msra.mxu0 %v1067
    %1685 = vmatprep.mubr.bf16.mxu0 %v348
    %1686 = vmatmul.mubr.bf16.gmra.mxu0 %v347
    %v1687 = vpop.f32.mrf.mxu0
    %v1688 = vadd.f32 %v316, %v1687
    %v1689 = vpop.f32.mrf.mxu0
    %v1690 = vadd.f32 %v320, %v1689
    %v1691 = vpop.f32.mrf.mxu0
    %v1692 = vadd.f32 %v316, %v1691
    %v1693 = vpop.f32.mrf.mxu0
    %v1694 = vadd.f32 %v320, %v1693
    %1695 = vdwg.mxu0
    %1696 = vmatprep.subr.bf16.mxu0 %v1128
    %1697 = vmatpush1.bf16.msra.mxu0 %v1127
    %1698 = vmatprep.subr.bf16.mxu0 %v1124
    %1699 = vmatpush1.bf16.msra.mxu0 %v1123
    %1700 = vmatprep.subr.bf16.mxu0 %v1120
    %1701 = vmatpush1.bf16.msra.mxu0 %v1119
    %1702 = vmatprep.subr.bf16.mxu0 %v1116
    %1703 = vmatpush1.bf16.msra.mxu0 %v1115
    %1704 = vmatprep.subr.bf16.mxu0 %v1112
    %1705 = vmatpush1.bf16.msra.mxu0 %v1111
    %1706 = vmatprep.subr.bf16.mxu0 %v1108
    %1707 = vmatpush1.bf16.msra.mxu0 %v1107
    %1708 = vmatprep.subr.bf16.mxu0 %v1104
    %1709 = vmatpush1.bf16.msra.mxu0 %v1103
    %1710 = vmatprep.subr.bf16.mxu0 %v1100
    %1711 = vmatpush1.bf16.msra.mxu0 %v1099
    %1712 = vmatprep.subr.bf16.mxu0 %v1160
    %1713 = vmatpush2.bf16.msra.mxu0 %v1159
    %1714 = vmatprep.subr.bf16.mxu0 %v1156
    %1715 = vmatpush2.bf16.msra.mxu0 %v1155
    %1716 = vmatprep.subr.bf16.mxu0 %v1152
    %1717 = vmatpush2.bf16.msra.mxu0 %v1151
    %1718 = vmatprep.subr.bf16.mxu0 %v1148
    %1719 = vmatpush2.bf16.msra.mxu0 %v1147
    %1720 = vmatprep.subr.bf16.mxu0 %v1144
    %1721 = vmatpush2.bf16.msra.mxu0 %v1143
    %1722 = vmatprep.subr.bf16.mxu0 %v1140
    %1723 = vmatpush2.bf16.msra.mxu0 %v1139
    %1724 = vmatprep.subr.bf16.mxu0 %v1136
    %1725 = vmatpush2.bf16.msra.mxu0 %v1135
    %1726 = vmatprep.subr.bf16.mxu0 %v1132
    %1727 = vmatpush2.bf16.msra.mxu0 %v1131
    %1728 = vmatprep.mubr.bf16.mxu0 %v350
    %1729 = vmatmul.mubr.bf16.gmra.mxu0 %v349
    %v1730 = vpop.f32.mrf.mxu0
    %v1731 = vadd.f32 %v1688, %v1730
    %v1732 = vpop.f32.mrf.mxu0
    %v1733 = vadd.f32 %v1690, %v1732
    %v1734 = vpop.f32.mrf.mxu0
    %v1735 = vadd.f32 %v1692, %v1734
    %v1736 = vpop.f32.mrf.mxu0
    %v1737 = vadd.f32 %v1694, %v1736
    %1738 = vdwg.mxu0
    %1739 = vmatprep.subr.bf16.mxu0 %v1192
    %1740 = vmatpush1.bf16.msra.mxu0 %v1191
    %1741 = vmatprep.subr.bf16.mxu0 %v1188
    %1742 = vmatpush1.bf16.msra.mxu0 %v1187
    %1743 = vmatprep.subr.bf16.mxu0 %v1184
    %1744 = vmatpush1.bf16.msra.mxu0 %v1183
    %1745 = vmatprep.subr.bf16.mxu0 %v1180
    %1746 = vmatpush1.bf16.msra.mxu0 %v1179
    %1747 = vmatprep.subr.bf16.mxu0 %v1176
    %1748 = vmatpush1.bf16.msra.mxu0 %v1175
    %1749 = vmatprep.subr.bf16.mxu0 %v1172
    %1750 = vmatpush1.bf16.msra.mxu0 %v1171
    %1751 = vmatprep.subr.bf16.mxu0 %v1168
    %1752 = vmatpush1.bf16.msra.mxu0 %v1167
    %1753 = vmatprep.subr.bf16.mxu0 %v1164
    %1754 = vmatpush1.bf16.msra.mxu0 %v1163
    %1755 = vmatprep.subr.bf16.mxu0 %v1224
    %1756 = vmatpush2.bf16.msra.mxu0 %v1223
    %1757 = vmatprep.subr.bf16.mxu0 %v1220
    %1758 = vmatpush2.bf16.msra.mxu0 %v1219
    %1759 = vmatprep.subr.bf16.mxu0 %v1216
    %1760 = vmatpush2.bf16.msra.mxu0 %v1215
    %1761 = vmatprep.subr.bf16.mxu0 %v1212
    %1762 = vmatpush2.bf16.msra.mxu0 %v1211
    %1763 = vmatprep.subr.bf16.mxu0 %v1208
    %1764 = vmatpush2.bf16.msra.mxu0 %v1207
    %1765 = vmatprep.subr.bf16.mxu0 %v1204
    %1766 = vmatpush2.bf16.msra.mxu0 %v1203
    %1767 = vmatprep.subr.bf16.mxu0 %v1200
    %1768 = vmatpush2.bf16.msra.mxu0 %v1199
    %1769 = vmatprep.subr.bf16.mxu0 %v1196
    %1770 = vmatpush2.bf16.msra.mxu0 %v1195
    %1771 = vmatprep.mubr.bf16.mxu0 %v352
    %1772 = vmatmul.mubr.bf16.gmra.mxu0 %v351
    %v1773 = vpop.f32.mrf.mxu0
    %v1774 = vadd.f32 %v1731, %v1773
    %v1775 = vpop.f32.mrf.mxu0
    %v1776 = vadd.f32 %v1733, %v1775
    %v1777 = vpop.f32.mrf.mxu0
    %v1778 = vadd.f32 %v1735, %v1777
    %v1779 = vpop.f32.mrf.mxu0
    %v1780 = vadd.f32 %v1737, %v1779
    %1781 = vdwg.mxu0
    %1782 = vmatprep.subr.bf16.mxu0 %v1256
    %1783 = vmatpush1.bf16.msra.mxu0 %v1255
    %1784 = vmatprep.subr.bf16.mxu0 %v1252
    %1785 = vmatpush1.bf16.msra.mxu0 %v1251
    %1786 = vmatprep.subr.bf16.mxu0 %v1248
    %1787 = vmatpush1.bf16.msra.mxu0 %v1247
    %1788 = vmatprep.subr.bf16.mxu0 %v1244
    %1789 = vmatpush1.bf16.msra.mxu0 %v1243
    %1790 = vmatprep.subr.bf16.mxu0 %v1240
    %1791 = vmatpush1.bf16.msra.mxu0 %v1239
    %1792 = vmatprep.subr.bf16.mxu0 %v1236
    %1793 = vmatpush1.bf16.msra.mxu0 %v1235
    %1794 = vmatprep.subr.bf16.mxu0 %v1232
    %1795 = vmatpush1.bf16.msra.mxu0 %v1231
    %1796 = vmatprep.subr.bf16.mxu0 %v1228
    %1797 = vmatpush1.bf16.msra.mxu0 %v1227
    %1798 = vmatprep.subr.bf16.mxu0 0
    %1799 = vmatpush2.bf16.msra.mxu0 0
    %1800 = vmatprep.subr.bf16.mxu0 0
    %1801 = vmatpush2.bf16.msra.mxu0 0
    %1802 = vmatprep.subr.bf16.mxu0 0
    %1803 = vmatpush2.bf16.msra.mxu0 0
    %1804 = vmatprep.subr.bf16.mxu0 0
    %1805 = vmatpush2.bf16.msra.mxu0 0
    %1806 = vmatprep.subr.bf16.mxu0 0
    %1807 = vmatpush2.bf16.msra.mxu0 0
    %1808 = vmatprep.subr.bf16.mxu0 0
    %1809 = vmatpush2.bf16.msra.mxu0 0
    %1810 = vmatprep.subr.bf16.mxu0 0
    %1811 = vmatpush2.bf16.msra.mxu0 0
    %1812 = vmatprep.subr.bf16.mxu0 0
    %1813 = vmatpush2.bf16.msra.mxu0 0
    %1814 = vmatprep.mubr.bf16.mxu0 0
    %1815 = vmatmul.mubr.bf16.gmra.mxu0 %v353
    %v1816 = vpop.f32.mrf.mxu0
    %v1817 = vadd.f32 %v1774, %v1816
    %v1818 = vpop.f32.mrf.mxu0
    %v1819 = vadd.f32 %v1776, %v1818
    %v1820 = vpop.f32.mrf.mxu0
    %v1821 = vadd.f32 %v1778, %v1820
    %v1822 = vpop.f32.mrf.mxu0
    %v1823 = vadd.f32 %v1780, %v1822
    %1824 = vdwg.mxu0
    %vm1825 = vcmp.gt.f32.partialorder %v1645, 0.0
    %vm1826 = vcmp.gt.f32.partialorder %v1647, 0.0
    %vm1827 = vcmp.gt.f32.partialorder %v1817, 0.0
    %vm1828 = vcmp.gt.f32.partialorder %v1819, 0.0
    %vm1829 = vcmp.gt.f32.partialorder %v1649, 0.0
    %vm1830 = vcmp.gt.f32.partialorder %v1651, 0.0
    %vm1831 = vcmp.gt.f32.partialorder %v1821, 0.0
    %vm1832 = vcmp.gt.f32.partialorder %v1823, 0.0
    %v1833 = vmul.f32 %v1645, 0.2
    %v1834 = vmul.f32 %v1647, 0.2
    %v1835 = vmul.f32 %v1817, 0.2
    %v1836 = vmul.f32 %v1819, 0.2
    %v1837 = vmul.f32 %v1649, 0.2
    %v1838 = vmul.f32 %v1651, 0.2
    %v1839 = vmul.f32 %v1821, 0.2
    %v1840 = vmul.f32 %v1823, 0.2
    %v1841 = vsel %vm1825, %v1645, %v1833
    %v1842 = vsel %vm1826, %v1647, %v1834
    %v1843 = vsel %vm1827, %v1817, %v1835
    %v1844 = vsel %vm1828, %v1819, %v1836
    %v1845 = vsel %vm1829, %v1649, %v1837
    %v1846 = vsel %vm1830, %v1651, %v1838
    %v1847 = vsel %vm1831, %v1821, %v1839
    %v1848 = vsel %vm1832, %v1823, %v1840
    %v1849 = vpack.c.bf16 %v1845, %v1841
    %v1850 = vpack.c.bf16 %v1846, %v1842
    %v1851 = vpack.c.bf16 %v1847, %v1843
    %v1852 = vpack.c.bf16 %v1848, %v1844
    %v1853 = vld [vmem:[#allocation8] sm:$0xff]
    %v1854 = vld [vmem:[#allocation8 + $0x8] sm:$0xff]
    %v1855 = vld [vmem:[#allocation8 + $0x10] sm:$0xff]
    %v1856 = vld [vmem:[#allocation8 + $0x18] sm:$0xff]
    %v1857 = vld [vmem:[#allocation8 + $0x20] sm:$0xff]
    %v1858 = vld [vmem:[#allocation8 + $0x28] sm:$0xff]
    %v1859 = vld [vmem:[#allocation8 + $0x30] sm:$0xff]
    %v1860 = vld [vmem:[#allocation8 + $0x38] sm:$0xff]
    %v1861 = vld [vmem:[#allocation8 + $0x40] sm:$0xff]
    %v1862 = vld [vmem:[#allocation8 + $0x48] sm:$0xff]
    %v1863 = vld [vmem:[#allocation8 + $0x50] sm:$0xff]
    %v1864 = vld [vmem:[#allocation8 + $0x58] sm:$0xff]
    %v1865 = vld [vmem:[#allocation8 + $0x60] sm:$0xff]
    %v1866 = vld [vmem:[#allocation8 + $0x68] sm:$0xff]
    %v1867 = vld [vmem:[#allocation8 + $0x70] sm:$0xff]
    %v1868 = vld [vmem:[#allocation8 + $0x78] sm:$0xff]
    %v1869 = vld [vmem:[#allocation8 + $0x80] sm:$0xff]
    %v1870 = vld [vmem:[#allocation8 + $0x88] sm:$0xff]
    %v1871 = vld [vmem:[#allocation8 + $0x90] sm:$0xff]
    %v1872 = vld [vmem:[#allocation8 + $0x98] sm:$0xff]
    %v1873 = vld [vmem:[#allocation8 + $0xa0] sm:$0xff]
    %v1874 = vld [vmem:[#allocation8 + $0xa8] sm:$0xff]
    %v1875 = vld [vmem:[#allocation8 + $0xb0] sm:$0xff]
    %v1876 = vld [vmem:[#allocation8 + $0xb8] sm:$0xff]
    %v1877 = vld [vmem:[#allocation8 + $0xc0] sm:$0xff]
    %v1878 = vld [vmem:[#allocation8 + $0xc8] sm:$0xff]
    %v1879 = vld [vmem:[#allocation8 + $0xd0] sm:$0xff]
    %v1880 = vld [vmem:[#allocation8 + $0xd8] sm:$0xff]
    %v1881 = vld [vmem:[#allocation8 + $0xe0] sm:$0xff]
    %v1882 = vld [vmem:[#allocation8 + $0xe8] sm:$0xff]
    %v1883 = vld [vmem:[#allocation8 + $0xf0] sm:$0xff]
    %v1884 = vld [vmem:[#allocation8 + $0xf8] sm:$0xff]
    %v1885 = vld [vmem:[#allocation8 + $0x100] sm:$0xff]
    %v1886 = vld [vmem:[#allocation8 + $0x108] sm:$0xff]
    %v1887 = vld [vmem:[#allocation8 + $0x110] sm:$0xff]
    %v1888 = vld [vmem:[#allocation8 + $0x118] sm:$0xff]
    %v1889 = vld [vmem:[#allocation8 + $0x120] sm:$0xff]
    %v1890 = vld [vmem:[#allocation8 + $0x128] sm:$0xff]
    %v1891 = vld [vmem:[#allocation8 + $0x130] sm:$0xff]
    %v1892 = vld [vmem:[#allocation8 + $0x138] sm:$0xff]
    %v1893 = vld [vmem:[#allocation8 + $0x140] sm:$0xff]
    %v1894 = vld [vmem:[#allocation8 + $0x148] sm:$0xff]
    %v1895 = vld [vmem:[#allocation8 + $0x150] sm:$0xff]
    %v1896 = vld [vmem:[#allocation8 + $0x158] sm:$0xff]
    %v1897 = vld [vmem:[#allocation8 + $0x160] sm:$0xff]
    %v1898 = vld [vmem:[#allocation8 + $0x168] sm:$0xff]
    %v1899 = vld [vmem:[#allocation8 + $0x170] sm:$0xff]
    %v1900 = vld [vmem:[#allocation8 + $0x178] sm:$0xff]
    %v1901 = vld [vmem:[#allocation8 + $0x180] sm:$0xff]
    %v1902 = vld [vmem:[#allocation8 + $0x188] sm:$0xff]
    %v1903 = vld [vmem:[#allocation8 + $0x190] sm:$0xff]
    %v1904 = vld [vmem:[#allocation8 + $0x198] sm:$0xff]
    %v1905 = vld [vmem:[#allocation8 + $0x1a0] sm:$0xff]
    %v1906 = vld [vmem:[#allocation8 + $0x1a8] sm:$0xff]
    %v1907 = vld [vmem:[#allocation8 + $0x1b0] sm:$0xff]
    %v1908 = vld [vmem:[#allocation8 + $0x1b8] sm:$0xff]
    %v1909 = vld [vmem:[#allocation8 + $0x1c0] sm:$0xff]
    %v1910 = vld [vmem:[#allocation8 + $0x1c8] sm:$0xff]
    %v1911 = vld [vmem:[#allocation8 + $0x1d0] sm:$0xff]
    %v1912 = vld [vmem:[#allocation8 + $0x1d8] sm:$0xff]
    %v1913 = vld [vmem:[#allocation8 + $0x1e0] sm:$0xff]
    %v1914 = vld [vmem:[#allocation8 + $0x1e8] sm:$0xff]
    %v1915 = vld [vmem:[#allocation8 + $0x1f0] sm:$0xff]
    %v1916 = vld [vmem:[#allocation8 + $0x1f8] sm:$0xff]
    %v1917 = vld [vmem:[%s4] sm:$0x3]
    %v1919 = vlaneseq
    %v1920 = vshrl.u32 %v1919, 7
    %v1921 = vsub.s32 0, %v1920
    %v1922 = vrot.slane %v1917, %v1921
    %v1923 = vlaneseq
    %v1924 = vshrl.u32 %v1923, 7
    %v1925 = vsub.s32 1, %v1924
    %v1926 = vrot.slane %v1917, %v1925
    %v1993 = vunpack.c.l.b16 %v1853
    %v1994 = vunpack.c.h.b16 %v1853
    %v1995 = vunpack.c.l.b16 %v1854
    %v1996 = vunpack.c.h.b16 %v1854
    %v1997 = vunpack.c.l.b16 %v1855
    %v1998 = vunpack.c.h.b16 %v1855
    %v1999 = vunpack.c.l.b16 %v1856
    %v2000 = vunpack.c.h.b16 %v1856
    %v2001 = vunpack.c.l.b16 %v1857
    %v2002 = vunpack.c.h.b16 %v1857
    %v2003 = vunpack.c.l.b16 %v1858
    %v2004 = vunpack.c.h.b16 %v1858
    %v2005 = vunpack.c.l.b16 %v1859
    %v2006 = vunpack.c.h.b16 %v1859
    %v2007 = vunpack.c.l.b16 %v1860
    %v2008 = vunpack.c.h.b16 %v1860
    %v2009 = vunpack.c.l.b16 %v1861
    %v2010 = vunpack.c.h.b16 %v1861
    %v2011 = vunpack.c.l.b16 %v1862
    %v2012 = vunpack.c.h.b16 %v1862
    %v2013 = vunpack.c.l.b16 %v1863
    %v2014 = vunpack.c.h.b16 %v1863
    %v2015 = vunpack.c.l.b16 %v1864
    %v2016 = vunpack.c.h.b16 %v1864
    %v2017 = vunpack.c.l.b16 %v1865
    %v2018 = vunpack.c.h.b16 %v1865
    %v2019 = vunpack.c.l.b16 %v1866
    %v2020 = vunpack.c.h.b16 %v1866
    %v2021 = vunpack.c.l.b16 %v1867
    %v2022 = vunpack.c.h.b16 %v1867
    %v2023 = vunpack.c.l.b16 %v1868
    %v2024 = vunpack.c.h.b16 %v1868
    %v2025 = vunpack.c.l.b16 %v1869
    %v2026 = vunpack.c.h.b16 %v1869
    %v2027 = vunpack.c.l.b16 %v1870
    %v2028 = vunpack.c.h.b16 %v1870
    %v2029 = vunpack.c.l.b16 %v1871
    %v2030 = vunpack.c.h.b16 %v1871
    %v2031 = vunpack.c.l.b16 %v1872
    %v2032 = vunpack.c.h.b16 %v1872
    %v2033 = vunpack.c.l.b16 %v1873
    %v2034 = vunpack.c.h.b16 %v1873
    %v2035 = vunpack.c.l.b16 %v1874
    %v2036 = vunpack.c.h.b16 %v1874
    %v2037 = vunpack.c.l.b16 %v1875
    %v2038 = vunpack.c.h.b16 %v1875
    %v2039 = vunpack.c.l.b16 %v1876
    %v2040 = vunpack.c.h.b16 %v1876
    %v2041 = vunpack.c.l.b16 %v1877
    %v2042 = vunpack.c.h.b16 %v1877
    %v2043 = vunpack.c.l.b16 %v1878
    %v2044 = vunpack.c.h.b16 %v1878
    %v2045 = vunpack.c.l.b16 %v1879
    %v2046 = vunpack.c.h.b16 %v1879
    %v2047 = vunpack.c.l.b16 %v1880
    %v2048 = vunpack.c.h.b16 %v1880
    %v2049 = vunpack.c.l.b16 %v1881
    %v2050 = vunpack.c.h.b16 %v1881
    %v2051 = vunpack.c.l.b16 %v1882
    %v2052 = vunpack.c.h.b16 %v1882
    %v2053 = vunpack.c.l.b16 %v1883
    %v2054 = vunpack.c.h.b16 %v1883
    %v2055 = vunpack.c.l.b16 %v1884
    %v2056 = vunpack.c.h.b16 %v1884
    %v2057 = vunpack.c.l.b16 %v1885
    %v2058 = vunpack.c.h.b16 %v1885
    %v2059 = vunpack.c.l.b16 %v1886
    %v2060 = vunpack.c.h.b16 %v1886
    %v2061 = vunpack.c.l.b16 %v1887
    %v2062 = vunpack.c.h.b16 %v1887
    %v2063 = vunpack.c.l.b16 %v1888
    %v2064 = vunpack.c.h.b16 %v1888
    %v2065 = vunpack.c.l.b16 %v1889
    %v2066 = vunpack.c.h.b16 %v1889
    %v2067 = vunpack.c.l.b16 %v1890
    %v2068 = vunpack.c.h.b16 %v1890
    %v2069 = vunpack.c.l.b16 %v1891
    %v2070 = vunpack.c.h.b16 %v1891
    %v2071 = vunpack.c.l.b16 %v1892
    %v2072 = vunpack.c.h.b16 %v1892
    %v2073 = vunpack.c.l.b16 %v1893
    %v2074 = vunpack.c.h.b16 %v1893
    %v2075 = vunpack.c.l.b16 %v1894
    %v2076 = vunpack.c.h.b16 %v1894
    %v2077 = vunpack.c.l.b16 %v1895
    %v2078 = vunpack.c.h.b16 %v1895
    %v2079 = vunpack.c.l.b16 %v1896
    %v2080 = vunpack.c.h.b16 %v1896
    %v2081 = vunpack.c.l.b16 %v1897
    %v2082 = vunpack.c.h.b16 %v1897
    %v2083 = vunpack.c.l.b16 %v1898
    %v2084 = vunpack.c.h.b16 %v1898
    %v2085 = vunpack.c.l.b16 %v1899
    %v2086 = vunpack.c.h.b16 %v1899
    %v2087 = vunpack.c.l.b16 %v1900
    %v2088 = vunpack.c.h.b16 %v1900
    %v2089 = vunpack.c.l.b16 %v1901
    %v2090 = vunpack.c.h.b16 %v1901
    %v2091 = vunpack.c.l.b16 %v1902
    %v2092 = vunpack.c.h.b16 %v1902
    %v2093 = vunpack.c.l.b16 %v1903
    %v2094 = vunpack.c.h.b16 %v1903
    %v2095 = vunpack.c.l.b16 %v1904
    %v2096 = vunpack.c.h.b16 %v1904
    %v2097 = vunpack.c.l.b16 %v1905
    %v2098 = vunpack.c.h.b16 %v1905
    %v2099 = vunpack.c.l.b16 %v1906
    %v2100 = vunpack.c.h.b16 %v1906
    %v2101 = vunpack.c.l.b16 %v1907
    %v2102 = vunpack.c.h.b16 %v1907
    %v2103 = vunpack.c.l.b16 %v1908
    %v2104 = vunpack.c.h.b16 %v1908
    %v2105 = vunpack.c.l.b16 %v1909
    %v2106 = vunpack.c.h.b16 %v1909
    %v2107 = vunpack.c.l.b16 %v1910
    %v2108 = vunpack.c.h.b16 %v1910
    %v2109 = vunpack.c.l.b16 %v1911
    %v2110 = vunpack.c.h.b16 %v1911
    %v2111 = vunpack.c.l.b16 %v1912
    %v2112 = vunpack.c.h.b16 %v1912
    %v2113 = vunpack.c.l.b16 %v1913
    %v2114 = vunpack.c.h.b16 %v1913
    %v2115 = vunpack.c.l.b16 %v1914
    %v2116 = vunpack.c.h.b16 %v1914
    %v2117 = vunpack.c.l.b16 %v1915
    %v2118 = vunpack.c.h.b16 %v1915
    %v2119 = vunpack.c.l.b16 %v1916
    %v2120 = vunpack.c.h.b16 %v1916
    %v2121 = vpack.c.b16 %v1995, %v1993
    %v2122 = vpack.c.b16 %v1996, %v1994
    %v2123 = vpack.c.b16 %v1999, %v1997
    %v2124 = vpack.c.b16 %v2000, %v1998
    %v2125 = vpack.c.b16 %v2003, %v2001
    %v2126 = vpack.c.b16 %v2004, %v2002
    %v2127 = vpack.c.b16 %v2007, %v2005
    %v2128 = vpack.c.b16 %v2008, %v2006
    %v2129 = vpack.c.b16 %v2011, %v2009
    %v2130 = vpack.c.b16 %v2012, %v2010
    %v2131 = vpack.c.b16 %v2015, %v2013
    %v2132 = vpack.c.b16 %v2016, %v2014
    %v2133 = vpack.c.b16 %v2019, %v2017
    %v2134 = vpack.c.b16 %v2020, %v2018
    %v2135 = vpack.c.b16 %v2023, %v2021
    %v2136 = vpack.c.b16 %v2024, %v2022
    %v2137 = vpack.c.b16 %v2027, %v2025
    %v2138 = vpack.c.b16 %v2028, %v2026
    %v2139 = vpack.c.b16 %v2031, %v2029
    %v2140 = vpack.c.b16 %v2032, %v2030
    %v2141 = vpack.c.b16 %v2035, %v2033
    %v2142 = vpack.c.b16 %v2036, %v2034
    %v2143 = vpack.c.b16 %v2039, %v2037
    %v2144 = vpack.c.b16 %v2040, %v2038
    %v2145 = vpack.c.b16 %v2043, %v2041
    %v2146 = vpack.c.b16 %v2044, %v2042
    %v2147 = vpack.c.b16 %v2047, %v2045
    %v2148 = vpack.c.b16 %v2048, %v2046
    %v2149 = vpack.c.b16 %v2051, %v2049
    %v2150 = vpack.c.b16 %v2052, %v2050
    %v2151 = vpack.c.b16 %v2055, %v2053
    %v2152 = vpack.c.b16 %v2056, %v2054
    %v2153 = vpack.c.b16 %v2059, %v2057
    %v2154 = vpack.c.b16 %v2060, %v2058
    %v2155 = vpack.c.b16 %v2063, %v2061
    %v2156 = vpack.c.b16 %v2064, %v2062
    %v2157 = vpack.c.b16 %v2067, %v2065
    %v2158 = vpack.c.b16 %v2068, %v2066
    %v2159 = vpack.c.b16 %v2071, %v2069
    %v2160 = vpack.c.b16 %v2072, %v2070
    %v2161 = vpack.c.b16 %v2075, %v2073
    %v2162 = vpack.c.b16 %v2076, %v2074
    %v2163 = vpack.c.b16 %v2079, %v2077
    %v2164 = vpack.c.b16 %v2080, %v2078
    %v2165 = vpack.c.b16 %v2083, %v2081
    %v2166 = vpack.c.b16 %v2084, %v2082
    %v2167 = vpack.c.b16 %v2087, %v2085
    %v2168 = vpack.c.b16 %v2088, %v2086
    %v2169 = vpack.c.b16 %v2091, %v2089
    %v2170 = vpack.c.b16 %v2092, %v2090
    %v2171 = vpack.c.b16 %v2095, %v2093
    %v2172 = vpack.c.b16 %v2096, %v2094
    %v2173 = vpack.c.b16 %v2099, %v2097
    %v2174 = vpack.c.b16 %v2100, %v2098
    %v2175 = vpack.c.b16 %v2103, %v2101
    %v2176 = vpack.c.b16 %v2104, %v2102
    %v2177 = vpack.c.b16 %v2107, %v2105
    %v2178 = vpack.c.b16 %v2108, %v2106
    %v2179 = vpack.c.b16 %v2111, %v2109
    %v2180 = vpack.c.b16 %v2112, %v2110
    %v2181 = vpack.c.b16 %v2115, %v2113
    %v2182 = vpack.c.b16 %v2116, %v2114
    %v2183 = vpack.c.b16 %v2119, %v2117
    %v2184 = vpack.c.b16 %v2120, %v2118
    %2249 = vmatprep.subr.bf16.mxu0 %v2136
    %2250 = vmatpush1.bf16.msra.mxu0 %v2135
    %2251 = vmatprep.subr.bf16.mxu0 %v2134
    %2252 = vmatpush1.bf16.msra.mxu0 %v2133
    %2253 = vmatprep.subr.bf16.mxu0 %v2132
    %2254 = vmatpush1.bf16.msra.mxu0 %v2131
    %2255 = vmatprep.subr.bf16.mxu0 %v2130
    %2256 = vmatpush1.bf16.msra.mxu0 %v2129
    %2257 = vmatprep.subr.bf16.mxu0 %v2128
    %2258 = vmatpush1.bf16.msra.mxu0 %v2127
    %2259 = vmatprep.subr.bf16.mxu0 %v2126
    %2260 = vmatpush1.bf16.msra.mxu0 %v2125
    %2261 = vmatprep.subr.bf16.mxu0 %v2124
    %2262 = vmatpush1.bf16.msra.mxu0 %v2123
    %2263 = vmatprep.subr.bf16.mxu0 %v2122
    %2264 = vmatpush1.bf16.msra.mxu0 %v2121
    %2265 = vmatprep.subr.bf16.mxu0 %v2152
    %2266 = vmatpush2.bf16.msra.mxu0 %v2151
    %2267 = vmatprep.subr.bf16.mxu0 %v2150
    %2268 = vmatpush2.bf16.msra.mxu0 %v2149
    %2269 = vmatprep.subr.bf16.mxu0 %v2148
    %2270 = vmatpush2.bf16.msra.mxu0 %v2147
    %2271 = vmatprep.subr.bf16.mxu0 %v2146
    %2272 = vmatpush2.bf16.msra.mxu0 %v2145
    %2273 = vmatprep.subr.bf16.mxu0 %v2144
    %2274 = vmatpush2.bf16.msra.mxu0 %v2143
    %2275 = vmatprep.subr.bf16.mxu0 %v2142
    %2276 = vmatpush2.bf16.msra.mxu0 %v2141
    %2277 = vmatprep.subr.bf16.mxu0 %v2140
    %2278 = vmatpush2.bf16.msra.mxu0 %v2139
    %2279 = vmatprep.subr.bf16.mxu0 %v2138
    %2280 = vmatpush2.bf16.msra.mxu0 %v2137
    %2281 = vmatprep.mubr.bf16.mxu0 %v1850
    %2282 = vmatmul.mubr.bf16.gmra.mxu0 %v1849
    %v2283 = vpop.f32.mrf.mxu0
    %v2284 = vadd.f32 %v1922, %v2283
    %v2285 = vpop.f32.mrf.mxu0
    %v2286 = vadd.f32 %v1926, %v2285
    %v2287 = vpop.f32.mrf.mxu0
    %v2288 = vadd.f32 %v1922, %v2287
    %v2289 = vpop.f32.mrf.mxu0
    %v2290 = vadd.f32 %v1926, %v2289
    %2291 = vdwg.mxu0
    %2292 = vmatprep.subr.bf16.mxu0 %v2168
    %2293 = vmatpush1.bf16.msra.mxu0 %v2167
    %2294 = vmatprep.subr.bf16.mxu0 %v2166
    %2295 = vmatpush1.bf16.msra.mxu0 %v2165
    %2296 = vmatprep.subr.bf16.mxu0 %v2164
    %2297 = vmatpush1.bf16.msra.mxu0 %v2163
    %2298 = vmatprep.subr.bf16.mxu0 %v2162
    %2299 = vmatpush1.bf16.msra.mxu0 %v2161
    %2300 = vmatprep.subr.bf16.mxu0 %v2160
    %2301 = vmatpush1.bf16.msra.mxu0 %v2159
    %2302 = vmatprep.subr.bf16.mxu0 %v2158
    %2303 = vmatpush1.bf16.msra.mxu0 %v2157
    %2304 = vmatprep.subr.bf16.mxu0 %v2156
    %2305 = vmatpush1.bf16.msra.mxu0 %v2155
    %2306 = vmatprep.subr.bf16.mxu0 %v2154
    %2307 = vmatpush1.bf16.msra.mxu0 %v2153
    %2308 = vmatprep.subr.bf16.mxu0 %v2184
    %2309 = vmatpush2.bf16.msra.mxu0 %v2183
    %2310 = vmatprep.subr.bf16.mxu0 %v2182
    %2311 = vmatpush2.bf16.msra.mxu0 %v2181
    %2312 = vmatprep.subr.bf16.mxu0 %v2180
    %2313 = vmatpush2.bf16.msra.mxu0 %v2179
    %2314 = vmatprep.subr.bf16.mxu0 %v2178
    %2315 = vmatpush2.bf16.msra.mxu0 %v2177
    %2316 = vmatprep.subr.bf16.mxu0 %v2176
    %2317 = vmatpush2.bf16.msra.mxu0 %v2175
    %2318 = vmatprep.subr.bf16.mxu0 %v2174
    %2319 = vmatpush2.bf16.msra.mxu0 %v2173
    %2320 = vmatprep.subr.bf16.mxu0 %v2172
    %2321 = vmatpush2.bf16.msra.mxu0 %v2171
    %2322 = vmatprep.subr.bf16.mxu0 %v2170
    %2323 = vmatpush2.bf16.msra.mxu0 %v2169
    %2324 = vmatprep.mubr.bf16.mxu0 %v1852
    %2325 = vmatmul.mubr.bf16.gmra.mxu0 %v1851
    %v2326 = vpop.f32.mrf.mxu0
    %v2327 = vadd.f32 %v2284, %v2326
    %v2328 = vpop.f32.mrf.mxu0
    %v2329 = vadd.f32 %v2286, %v2328
    %v2330 = vpop.f32.mrf.mxu0
    %v2331 = vadd.f32 %v2288, %v2330
    %v2332 = vpop.f32.mrf.mxu0
    %v2333 = vadd.f32 %v2290, %v2332
    %2334 = vdwg.mxu0
    %vm2335 = vcmp.gt.f32.partialorder %v2327, 0.0
    %vm2336 = vcmp.gt.f32.partialorder %v2329, 0.0
    %vm2337 = vcmp.gt.f32.partialorder %v2331, 0.0
    %vm2338 = vcmp.gt.f32.partialorder %v2333, 0.0
    %v2339 = vmul.f32 %v2327, 0.2
    %v2340 = vmul.f32 %v2329, 0.2
    %v2341 = vmul.f32 %v2331, 0.2
    %v2342 = vmul.f32 %v2333, 0.2
    %v2343 = vsel %vm2335, %v2327, %v2339
    %v2344 = vsel %vm2336, %v2329, %v2340
    %v2345 = vsel %vm2337, %v2331, %v2341
    %v2346 = vsel %vm2338, %v2333, %v2342
    %v2347 = vld [vmem:[%s5] sm:$0x3]
    %v2348 = vld [vmem:[#allocation2] sm:$0x1]
    %2350 = vset.pattern.permute.xlu0 0
    %2351 = vperm.xlu0 %2350, %v2348
    %v2352 = vpop.permute.xlu0 %2351
    %v2354 = vlaneseq
    %v2355 = vshrl.u32 %v2354, 7
    %v2356 = vsub.s32 0, %v2355
    %v2357 = vrot.slane %v2352, %v2356
    %v2359 = vlaneseq
    %v2360 = vshrl.u32 %v2359, 7
    %v2361 = vsub.s32 0, %v2360
    %v2362 = vrot.slane %v2347, %v2361
    %v2363 = vlaneseq
    %v2364 = vshrl.u32 %v2363, 7
    %v2365 = vsub.s32 1, %v2364
    %v2366 = vrot.slane %v2347, %v2365
    %2369 = vmatprep.subr.mxu0 0.0
    %2370 = vmatpush1.xpose.msra.mxu0 0.0
    %2371 = vmatprep.subr.mxu0 0.0
    %2372 = vmatpush1.xpose.msra.mxu0 0.0
    %2373 = vmatprep.subr.mxu0 0.0
    %2374 = vmatpush1.xpose.msra.mxu0 0.0
    %2375 = vmatprep.subr.mxu0 0.0
    %2376 = vmatpush1.xpose.msra.mxu0 0.0
    %2377 = vmatprep.subr.mxu0 0.0
    %2378 = vmatpush1.xpose.msra.mxu0 0.0
    %2379 = vmatprep.subr.mxu0 0.0
    %2380 = vmatpush1.xpose.msra.mxu0 0.0
    %2381 = vmatprep.subr.mxu0 0.0
    %2382 = vmatpush1.xpose.msra.mxu0 0.0
    %2383 = vmatprep.subr.mxu0 0.0
    %2384 = vmatpush1.xpose.msra.mxu0 0.0
    %2385 = vmatprep.subr.mxu0 0.0
    %2386 = vmatpush1.xpose.msra.mxu0 0.0
    %2387 = vmatprep.subr.mxu0 0.0
    %2388 = vmatpush1.xpose.msra.mxu0 0.0
    %2389 = vmatprep.subr.mxu0 0.0
    %2390 = vmatpush1.xpose.msra.mxu0 0.0
    %2391 = vmatprep.subr.mxu0 0.0
    %2392 = vmatpush1.xpose.msra.mxu0 0.0
    %2393 = vmatprep.subr.mxu0 0.0
    %2394 = vmatpush1.xpose.msra.mxu0 0.0
    %2395 = vmatprep.subr.mxu0 0.0
    %2396 = vmatpush1.xpose.msra.mxu0 0.0
    %2397 = vmatprep.subr.mxu0 %v2346
    %2398 = vmatpush1.xpose.msra.mxu0 %v2345
    %2399 = vmatprep.subr.mxu0 %v2344
    %2400 = vmatpush1.xpose.msra.mxu0 %v2343
    %2401 = vmatprep.subr.mxu0 0.0
    %2402 = vmatpush2.xpose.msra.mxu0 0.0
    %2403 = vmatprep.subr.mxu0 0.0
    %2404 = vmatpush2.xpose.msra.mxu0 0.0
    %2405 = vmatprep.subr.mxu0 0.0
    %2406 = vmatpush2.xpose.msra.mxu0 0.0
    %2407 = vmatprep.subr.mxu0 0.0
    %2408 = vmatpush2.xpose.msra.mxu0 0.0
    %2409 = vmatprep.subr.mxu0 0.0
    %2410 = vmatpush2.xpose.msra.mxu0 0.0
    %2411 = vmatprep.subr.mxu0 0.0
    %2412 = vmatpush2.xpose.msra.mxu0 0.0
    %2413 = vmatprep.subr.mxu0 0.0
    %2414 = vmatpush2.xpose.msra.mxu0 0.0
    %2415 = vmatprep.subr.mxu0 0.0
    %2416 = vmatpush2.xpose.msra.mxu0 0.0
    %2417 = vmatprep.subr.mxu0 0.0
    %2418 = vmatpush2.xpose.msra.mxu0 0.0
    %2419 = vmatprep.subr.mxu0 0.0
    %2420 = vmatpush2.xpose.msra.mxu0 0.0
    %2421 = vmatprep.subr.mxu0 0.0
    %2422 = vmatpush2.xpose.msra.mxu0 0.0
    %2423 = vmatprep.subr.mxu0 0.0
    %2424 = vmatpush2.xpose.msra.mxu0 0.0
    %2425 = vmatprep.subr.mxu0 0.0
    %2426 = vmatpush2.xpose.msra.mxu0 0.0
    %2427 = vmatprep.subr.mxu0 0.0
    %2428 = vmatpush2.xpose.msra.mxu0 0.0
    %2429 = vmatprep.subr.mxu0 0.0
    %2430 = vmatpush2.xpose.msra.mxu0 0.0
    %2431 = vmatprep.subr.mxu0 0.0
    %2432 = vmatpush2.xpose.msra.mxu0 0.0
    %2433 = vmatprep.mubr.f32.mxu0 %v2366
    %2434 = vmatmul.mubr.f32.gmra.mxu0 %v2362
    %v2435 = vpop.f32.mrf.mxu0
    %v2436 = vadd.f32 %v2357, %v2435
    %v2437 = vpop.f32.mrf.mxu0
    %2438 = vdwg.mxu0
    %v2439 = vand.u32 2147483647, %v2436
    %v2440 = vsub.f32 0.0, %v2439
    %v2441 = vmul.f32 %v2440, 1.442695
    %v2442 = vpow.pop %v2441
    %vm2443 = vcmp.ge.f32.partialorder %v2436, 0.0
    %v2444 = vsel %vm2443, 1.0, %v2442
    %v2445 = vadd.f32 %v2442, 1.0
    %v2446 = vrcp.pop %v2445
    %v2447 = vmul.f32 %v2444, %v2446
    %vm2448 = vcmask 122880
    %2449 = vst.msk [vmem:[#allocation9] sm:$0x1] %vm2448, %v2447
    // Predicated region
    $region42: #{tpu_custom_call.1} parent=1 // pred_check
      _
    $region43: #{tpu_custom_call.1} parent=1 // pred_check_branch
      %2451 = sbr.rel (0) target = $region45
    $region44: #{tpu_custom_call.1} parent=1 // pred_region
      %s2453 = ssub.s32 16, 16
      %2454 = vsyncadd [#allocation5], %s2453
      %s2456 = sshll.u32 [#allocation9], 4
      %s2457 = int_to_ptr.vmem [resolvable:$true] %s2456
      %2459 = dma.vmem_to_hbm [thread:$0]  %s2457, 16, %s7, [#allocation5]
    $region45: #{tpu_custom_call.1} parent=1 // pred_fallthru
      _
    // Predicated region
    $region46: #{tpu_custom_call.1} parent=1 // pred_check
      _
    $region47: #{tpu_custom_call.1} parent=1 // pred_check_branch
      %2461 = sbr.rel (0) target = $region49
    $region48: #{tpu_custom_call.1} parent=1 // pred_region
      %2462 = dma.done [#allocation5], 16
    $region49: #{tpu_custom_call.1} parent=1 // pred_fallthru
      _
    %2463 = vsyncpa [#allocation4], 1
    %2464 = vsyncpa [#allocation7], 1
    %2465 = vsyncpa [#allocation5], 1

</llo_original>
